<compile_context>
chip_gen: v6e
topology: v6e:2x2x1
jax: 0.10.0
libtpu: 0.0.40
codegen_flags: <defaults>
</compile_context>

<pallas_src>
import functools

import jax
import jax.numpy as jnp
from jax.experimental import pallas as pl
from jax.experimental.pallas import tpu as pltpu


_NEG = -1e30  # pad-class bias: exp() underflows to 0, never the row max/target.


def _classifier_kernel(x_ref, w1_ref, b1_ref, w2_ref, b2_ref, tgt_ref,
                       logits_ref, nll_ref):
    # ---- backbone: Linear + ReLU ----
    # x arrives f32; cast to bf16 here (VPU, hidden under the MXU) instead of a
    # separate wrapper-side XLA cast pass.
    x_bf = x_ref[...].astype(jnp.bfloat16)
    feats = jnp.dot(x_bf, w1_ref[...], preferred_element_type=jnp.float32)
    feats = jnp.maximum(feats + b1_ref[...], 0.0)

    # ---- output layer: Linear (class dim padded to 128 lanes) ----
    logits = jnp.dot(feats.astype(w2_ref.dtype), w2_ref[...],
                     preferred_element_type=jnp.float32) + b2_ref[...]
    logits_ref[...] = logits.astype(logits_ref.dtype)          # lane-dense store

    # ---- cross-entropy, numerically stable, all f32, keepdims layout ----
    m = jnp.max(logits, axis=-1, keepdims=True)                # (TM, 1)
    shifted = logits - m
    lse = jnp.log(jnp.sum(jnp.exp(shifted), axis=-1, keepdims=True))
    classes = jax.lax.broadcasted_iota(jnp.int32, logits.shape, 1)
    tgt_logit = jnp.sum(jnp.where(classes == tgt_ref[...], shifted, 0.0),
                        axis=-1, keepdims=True)                # shifted[target]
    nll_ref[...] = lse - tgt_logit                             # per-row NLL


def prepare_classifier_params(w1, b1, w2, b2, num_classes):
    """One-time weight prep (hoist out of the per-step hot path)."""
    d_in, feat = w1.shape
    c_pad = pl.cdiv(num_classes, 128) * 128                    # lane-dense classes
    w1_bf = w1.astype(jnp.bfloat16)
    b1_2d = b1.reshape(1, feat).astype(jnp.float32)
    w2_pad = jnp.zeros((feat, c_pad), jnp.float32).at[:, :num_classes].set(
        w2.astype(jnp.float32))
    w2_bf = w2_pad.astype(jnp.bfloat16)
    b2_pad = jnp.full((1, c_pad), _NEG, jnp.float32).at[0, :num_classes].set(
        b2.astype(jnp.float32))
    return dict(w1=w1_bf, b1=b1_2d, w2=w2_bf, b2=b2_pad,
                d_in=d_in, feat=feat, c_pad=c_pad, num_classes=num_classes)


def classifier_forward(x, targets, params, *, tile_rows=256,
                       logits_dtype=jnp.float32,
                       vmem_limit_bytes=48 * 1024 * 1024):
    """Fused backbone + output_layer + CrossEntropyLoss.

    Returns (loss, logits) exactly like Classifier.forward.  `params` comes
    from prepare_classifier_params (weights already padded / bf16-cast once).
    (`lengths` of the original signature only applies to LSTM backbones and is
    therefore not an argument here.)
    """
    B, d_in = x.shape
    assert d_in == params["d_in"]
    feat, c_pad = params["feat"], params["c_pad"]
    num_classes = params["num_classes"]

    # Clamp TM for tiny batches; 256+ fills the 256-wide MXUs on v6e/v7x.
    tile_rows = min(tile_rows, max(8, pl.cdiv(B, 8) * 8))
    n_tiles = pl.cdiv(B, tile_rows)
    if n_tiles > 1 and n_tiles % 2:
        n_tiles += 1                  # even tile count -> both v7x TCs busy
    b_pad = n_tiles * tile_rows

    # ---- glue: row padding only (no casts, no one-hot) ----
    x_p = jnp.pad(x.astype(jnp.float32), ((0, b_pad - B), (0, 0)))
    tgt_p = jnp.pad(targets.astype(jnp.int32), (0, b_pad - B)).reshape(b_pad, 1)

    flops = 2 * b_pad * (d_in * feat + feat * c_pad)
    bytes_accessed = (x_p.size * 4 + params["w1"].size * 2
                      + params["w2"].size * 2 + params["b1"].size * 4
                      + params["b2"].size * 4 + tgt_p.size * 4
                      + b_pad * c_pad * jnp.dtype(logits_dtype).itemsize
                      + b_pad * 4)

    logits_pad, nll_pad = pl.pallas_call(
        _classifier_kernel,
        grid=(n_tiles,),
        out_shape=(
            jax.ShapeDtypeStruct((b_pad, c_pad), logits_dtype),  # padded logits
            jax.ShapeDtypeStruct((b_pad, 1), jnp.float32),       # per-row NLL
        ),
        in_specs=[
            pl.BlockSpec((tile_rows, d_in), lambda i: (i, 0)),   # x tile (f32)
            pl.BlockSpec((d_in, feat), lambda i: (0, 0)),        # w1 (resident)
            pl.BlockSpec((1, feat), lambda i: (0, 0)),           # b1 (resident)
            pl.BlockSpec((feat, c_pad), lambda i: (0, 0)),       # w2 (resident)
            pl.BlockSpec((1, c_pad), lambda i: (0, 0)),          # b2 (resident)
            pl.BlockSpec((tile_rows, 1), lambda i: (i, 0)),      # targets tile
        ],
        out_specs=(
            pl.BlockSpec((tile_rows, c_pad), lambda i: (i, 0)),
            pl.BlockSpec((tile_rows, 1), lambda i: (i, 0)),
        ),
        compiler_params=pltpu.CompilerParams(
            dimension_semantics=("parallel",),
            vmem_limit_bytes=vmem_limit_bytes),
        cost_estimate=pl.CostEstimate(
            flops=flops,
            transcendentals=b_pad * (c_pad + 1),
            bytes_accessed=bytes_accessed),
    )(x_p, params["w1"], params["b1"], params["w2"], params["b2"], tgt_p)

    loss = jnp.sum(nll_pad[:B, 0]) / jnp.float32(B)     # mean over valid rows
    logits = logits_pad[:B, :num_classes]
    return loss, logits


def _reference(x, w1, b1, w2, b2, targets, num_classes):
    """Pure-JAX reference with the same bf16-operand / f32-accumulate math."""
    xb, w1b, w2b = (t.astype(jnp.bfloat16) for t in (x, w1, w2))
    feats = jnp.maximum(
        jnp.dot(xb, w1b, preferred_element_type=jnp.float32) + b1, 0.0)
    logits = jnp.dot(feats.astype(jnp.bfloat16), w2b,
                     preferred_element_type=jnp.float32) + b2
    logp = jax.nn.log_softmax(logits, axis=-1)
    nll = -jnp.take_along_axis(logp, targets[:, None], axis=-1)[:, 0]
    return jnp.mean(nll), logits


if __name__ == "__main__":
    # Shapes chosen to exercise the row tiling (2 x 256-row tiles from B=300,
    # with zero-padded tail rows) and the lane-dense class padding (C=16->128).
    B, D_IN, FEAT, NUM_CLASSES = 300, 128, 128, 16

    key = jax.random.PRNGKey(0)
    kx, kw1, kb1, kw2, kb2, kt = jax.random.split(key, 6)

    x = jax.random.normal(kx, (B, D_IN), dtype=jnp.float32)
    w1 = jax.random.normal(kw1, (D_IN, FEAT), dtype=jnp.float32) * 0.1
    b1 = jax.random.normal(kb1, (FEAT,), dtype=jnp.float32) * 0.1
    w2 = jax.random.normal(kw2, (FEAT, NUM_CLASSES), dtype=jnp.float32) * 0.1
    b2 = jax.random.normal(kb2, (NUM_CLASSES,), dtype=jnp.float32) * 0.1
    targets = jax.random.randint(kt, (B,), 0, NUM_CLASSES, dtype=jnp.int32)

    # Weight prep happens once, outside the hot path.
    params = prepare_classifier_params(w1, b1, w2, b2, NUM_CLASSES)

    loss, logits = classifier_forward(x, targets, params)
    jax.block_until_ready((loss, logits))

    ref_loss, ref_logits = _reference(x, w1, b1, w2, b2, targets, NUM_CLASSES)
    assert logits.shape == (B, NUM_CLASSES)
    assert jnp.allclose(logits, ref_logits, atol=2e-3, rtol=2e-3)
    assert jnp.allclose(loss, ref_loss, atol=2e-3, rtol=2e-3)

    print("KERNEL_OK")
</pallas_src>

<mosaic_0001>
module attributes {stable_mosaic.version = 11 : i64} {
  func.func @_classifier_kernel(%arg0: i32, %arg1: memref<256x128xf32, #tpu.memory_space<vmem>>, %arg2: memref<128x128xbf16, #tpu.memory_space<vmem>>, %arg3: memref<1x128xf32, #tpu.memory_space<vmem>>, %arg4: memref<128x128xbf16, #tpu.memory_space<vmem>>, %arg5: memref<1x128xf32, #tpu.memory_space<vmem>>, %arg6: memref<256x1xi32, #tpu.memory_space<vmem>>, %arg7: memref<256x128xf32, #tpu.memory_space<vmem>>, %arg8: memref<256x1xf32, #tpu.memory_space<vmem>>) attributes {dimension_semantics = [#tpu.dimension_semantics<parallel>], iteration_bounds = array<i64: 2>, scalar_prefetch = 0 : i64, scratch_operands = 0 : i64, tpu.core_type = #tpu.core_type<tc>, window_params = [{transform_indices = @transform_0, window_bounds = array<i64: 256, 128>}, {pipeline_mode = #tpu.pipeline_mode<synchronous>, transform_indices = @transform_1, window_bounds = array<i64: 128, 128>}, {pipeline_mode = #tpu.pipeline_mode<synchronous>, transform_indices = @transform_2, window_bounds = array<i64: 1, 128>}, {pipeline_mode = #tpu.pipeline_mode<synchronous>, transform_indices = @transform_3, window_bounds = array<i64: 128, 128>}, {pipeline_mode = #tpu.pipeline_mode<synchronous>, transform_indices = @transform_4, window_bounds = array<i64: 1, 128>}, {transform_indices = @transform_5, window_bounds = array<i64: 256, 1>}, {transform_indices = @transform_6, window_bounds = array<i64: 256, 128>}, {transform_indices = @transform_7, window_bounds = array<i64: 256, 1>}]} {
    %c0 = arith.constant 0 : index
    %c0_0 = arith.constant 0 : index
    %0 = vector.load %arg1[%c0, %c0_0] : memref<256x128xf32, #tpu.memory_space<vmem>>, vector<256x128xf32>
    %1 = arith.truncf %0 : vector<256x128xf32> to vector<256x128xbf16>
    %c0_1 = arith.constant 0 : index
    %c0_2 = arith.constant 0 : index
    %2 = vector.load %arg2[%c0_1, %c0_2] : memref<128x128xbf16, #tpu.memory_space<vmem>>, vector<128x128xbf16>
    %cst = arith.constant dense<0.000000e+00> : vector<256x128xf32>
    %3 = tpu.matmul %1, %2, %cst {dimension_numbers = #tpu.dot_dimension_numbers<[1], [0], [0], [1], [0, 0, 1, 1], [], []>} : vector<256x128xbf16>, vector<128x128xbf16>, vector<256x128xf32> -> vector<256x128xf32>
    %c0_3 = arith.constant 0 : index
    %c0_4 = arith.constant 0 : index
    %4 = vector.load %arg3[%c0_3, %c0_4] : memref<1x128xf32, #tpu.memory_space<vmem>>, vector<1x128xf32>
    %5 = vector.broadcast %4 : vector<1x128xf32> to vector<256x128xf32>
    %6 = arith.addf %3, %5 : vector<256x128xf32>
    %cst_5 = arith.constant 0.000000e+00 : f32
    %7 = vector.broadcast %cst_5 : f32 to vector<256x128xf32>
    %8 = arith.maximumf %6, %7 : vector<256x128xf32>
    %9 = arith.truncf %8 : vector<256x128xf32> to vector<256x128xbf16>
    %c0_6 = arith.constant 0 : index
    %c0_7 = arith.constant 0 : index
    %10 = vector.load %arg4[%c0_6, %c0_7] : memref<128x128xbf16, #tpu.memory_space<vmem>>, vector<128x128xbf16>
    %cst_8 = arith.constant dense<0.000000e+00> : vector<256x128xf32>
    %11 = tpu.matmul %9, %10, %cst_8 {dimension_numbers = #tpu.dot_dimension_numbers<[1], [0], [0], [1], [0, 0, 1, 1], [], []>} : vector<256x128xbf16>, vector<128x128xbf16>, vector<256x128xf32> -> vector<256x128xf32>
    %c0_9 = arith.constant 0 : index
    %c0_10 = arith.constant 0 : index
    %12 = vector.load %arg5[%c0_9, %c0_10] : memref<1x128xf32, #tpu.memory_space<vmem>>, vector<1x128xf32>
    %13 = vector.broadcast %12 : vector<1x128xf32> to vector<256x128xf32>
    %14 = arith.addf %11, %13 : vector<256x128xf32>
    %c0_11 = arith.constant 0 : index
    %c0_12 = arith.constant 0 : index
    %15 = vector.load %arg7[%c0_11, %c0_12] : memref<256x128xf32, #tpu.memory_space<vmem>>, vector<256x128xf32>
    tpu.vector_store %arg7[%c0_11, %c0_12], %14 {strides = array<i32>} : memref<256x128xf32, #tpu.memory_space<vmem>>, vector<256x128xf32>,
    %cst_13 = arith.constant dense<0xFF800000> : vector<256xf32>
    %16 = vector.multi_reduction <maximumf>, %14, %cst_13 [1] : vector<256x128xf32> to vector<256xf32>
    %17 = vector.shape_cast %16 : vector<256xf32> to vector<256x1xf32>
    %18 = vector.broadcast %17 : vector<256x1xf32> to vector<256x128xf32>
    %19 = arith.subf %14, %18 : vector<256x128xf32>
    %20 = math.exp %19 : vector<256x128xf32>
    %cst_14 = arith.constant dense<0.000000e+00> : vector<256xf32>
    %21 = vector.multi_reduction <add>, %20, %cst_14 [1] : vector<256x128xf32> to vector<256xf32>
    %22 = vector.shape_cast %21 : vector<256xf32> to vector<256x1xf32>
    %23 = math.log %22 : vector<256x1xf32>
    %24 = tpu.iota {dimensions = array<i32: 1>} : vector<256x128xi32>
    %c0_15 = arith.constant 0 : index
    %c0_16 = arith.constant 0 : index
    %25 = vector.load %arg6[%c0_15, %c0_16] : memref<256x1xi32, #tpu.memory_space<vmem>>, vector<256x1xi32>
    %26 = vector.broadcast %25 : vector<256x1xi32> to vector<256x128xi32>
    %27 = arith.cmpi eq, %24, %26 : vector<256x128xi32>
    %cst_17 = arith.constant 0.000000e+00 : f32
    %28 = vector.broadcast %cst_17 : f32 to vector<256x128xf32>
    %29 = arith.select %27, %19, %28 : vector<256x128xi1>, vector<256x128xf32>
    %cst_18 = arith.constant dense<0.000000e+00> : vector<256xf32>
    %30 = vector.multi_reduction <add>, %29, %cst_18 [1] : vector<256x128xf32> to vector<256xf32>
    %31 = vector.shape_cast %30 : vector<256xf32> to vector<256x1xf32>
    %32 = arith.subf %23, %31 : vector<256x1xf32>
    %c0_19 = arith.constant 0 : index
    %c0_20 = arith.constant 0 : index
    %33 = vector.load %arg8[%c0_19, %c0_20] : memref<256x1xf32, #tpu.memory_space<vmem>>, vector<256x1xf32>
    tpu.vector_store %arg8[%c0_19, %c0_20], %32 {strides = array<i32>} : memref<256x1xf32, #tpu.memory_space<vmem>>, vector<256x1xf32>,
    return
  }
  func.func @transform_0(%arg0: i32) -> (i32, i32) {
    %c0_i32 = arith.constant 0 : i32
    %c0_i32_0 = arith.constant 0 : i32
    return %arg0, %c0_i32 : i32, i32
  }
  func.func @transform_1(%arg0: i32) -> (i32, i32) {
    %c0_i32 = arith.constant 0 : i32
    %c0_i32_0 = arith.constant 0 : i32
    %c0_i32_1 = arith.constant 0 : i32
    return %c0_i32, %c0_i32_0 : i32, i32
  }
  func.func @transform_2(%arg0: i32) -> (i32, i32) {
    %c0_i32 = arith.constant 0 : i32
    %c0_i32_0 = arith.constant 0 : i32
    %c0_i32_1 = arith.constant 0 : i32
    return %c0_i32, %c0_i32_0 : i32, i32
  }
  func.func @transform_3(%arg0: i32) -> (i32, i32) {
    %c0_i32 = arith.constant 0 : i32
    %c0_i32_0 = arith.constant 0 : i32
    %c0_i32_1 = arith.constant 0 : i32
    return %c0_i32, %c0_i32_0 : i32, i32
  }
  func.func @transform_4(%arg0: i32) -> (i32, i32) {
    %c0_i32 = arith.constant 0 : i32
    %c0_i32_0 = arith.constant 0 : i32
    %c0_i32_1 = arith.constant 0 : i32
    return %c0_i32, %c0_i32_0 : i32, i32
  }
  func.func @transform_5(%arg0: i32) -> (i32, i32) {
    %c0_i32 = arith.constant 0 : i32
    %c0_i32_0 = arith.constant 0 : i32
    return %arg0, %c0_i32 : i32, i32
  }
  func.func @transform_6(%arg0: i32) -> (i32, i32) {
    %c0_i32 = arith.constant 0 : i32
    %c0_i32_0 = arith.constant 0 : i32
    return %arg0, %c0_i32 : i32, i32
  }
  func.func @transform_7(%arg0: i32) -> (i32, i32) {
    %c0_i32 = arith.constant 0 : i32
    %c0_i32_0 = arith.constant 0 : i32
    return %arg0, %c0_i32 : i32, i32
  }
}

</mosaic_0001>

<llo_original>
// kernel: tpu_custom_call.1
$region0: #{tpu_custom_call.1}
  #allocation0 [shape = 'u32[]', space=smem, size = 0x4, offset = 0x4, fixed_abs, tag = 'smem constant byte address 0x4 - core index']
  #allocation1 [shape = 'u32[144,128]{1,0:T(1,128)}', space=vmem, size = 0x12000, scoped, tag = 'internal scratch']
  %s0 = inlined_call_operand.vmem [shape: f32[512,128], index: 0, kind: input, shape index: {}]
  %s1 = inlined_call_operand.hbm [shape: bf16[128,128], index: 1, kind: input, shape index: {}]
  %s2 = inlined_call_operand.vmem [shape: f32[1,128], index: 2, kind: input, shape index: {}]
  %s3 = inlined_call_operand.hbm [shape: bf16[128,128], index: 3, kind: input, shape index: {}]
  %s4 = inlined_call_operand.vmem [shape: f32[1,128], index: 4, kind: input, shape index: {}]
  %s5 = inlined_call_operand.vmem [shape: s32[512,1], index: 5, kind: input, shape index: {}]
  %s6 = inlined_call_operand.hbm [shape: f32[512,128], index: 6, kind: output, shape index: {0}]
  %s7 = inlined_call_operand.vmem [shape: f32[512,1], index: 7, kind: output, shape index: {1}]
  %8 = xla_tuple %s6, %s7
  %s9 = sld [smem:[#allocation0]]
  $region73: #{tpu_custom_call.1} parent=0
    _
  %s11 = ssub.s32 1, %s9
  %s12 = scalar_select 0, %s11, %s9
  $region1: #{tpu_custom_call.1} parent=0
    #allocation2 [shape = 'u8[32768]{0}', space=vmem, size = 0x8000, scoped, tag = 'input window, operand 1, single buffered']
    #allocation3 [shape = 's32[2]{0}', space=sflag, size = 0x8, scoped, tag = 'scoped memory for tpu_custom_call.1']
    #allocation4 [shape = 's32[2]{0}', space=sflag, size = 0x8, scoped, tag = 'scoped memory for tpu_custom_call.1']
    #allocation5 [shape = 'u8[32768]{0}', space=vmem, size = 0x8000, scoped, tag = 'input window, operand 3, single buffered']
    #allocation6 [shape = 's32[1]{0}', space=sflag, size = 0x4, scoped, tag = 'scoped memory for tpu_custom_call.1']
    #allocation7 [shape = 'u8[262144]{0}', space=vmem, size = 0x40000, scoped, tag = 'output window, operand 0']
    %13 = vsyncpa [#allocation3], 0
    %14 = vsyncpa [#allocation6], 0
    %15 = vsyncpa [#allocation4], 0
    %s16 = scalar_lea.sflag [#allocation4], 1
    %17 = vsyncpa %s16, 0
    loop: start=0, step=1, limit=4
    $region2: #{tpu_custom_call.1} parent=1 // loop_pre_header
      _
    $region3: #{tpu_custom_call.1} parent=1 // loop_header
      %s19 = sphi 0, %s23
      %p20 = scmp.ge.s32.totalorder %s19, 4
      %s29 = sphi 0, %s31
      %s32 = sphi 0, %s29
      %s33 = sphi 0, %s32
      %s49 = sphi 0, %s33
      %s53 = sphi 0, %s53
      %s55 = sphi 0, %s53
      %s56 = sphi 0, %s55
      %s70 = sphi 0, %s56
      %s74 = sphi 0, %s74
      %s76 = sphi 0, %s74
      %s77 = sphi 0, %s76
      %s91 = sphi 0, %s77
      %s95 = sphi 0, %s95
      %s97 = sphi 0, %s95
      %s98 = sphi 0, %s97
      %s112 = sphi 0, %s98
      %s116 = sphi 0, %s116
      %s118 = sphi 0, %s116
      %s119 = sphi 0, %s118
      %s133 = sphi 0, %s119
      %s139 = sphi 0, %s141
      %s142 = sphi 0, %s139
      %s143 = sphi 0, %s142
      %s159 = sphi 0, %s143
      %s165 = sphi 0, %s167
      %s168 = sphi 0, %s165
      %s169 = sphi 0, %s168
      %s185 = sphi 0, %s169
      %s191 = sphi 0, %s193
      %s194 = sphi 0, %s191
      %s195 = sphi 0, %s194
      %s211 = sphi 0, %s195
    $region4: #{tpu_custom_call.1} parent=1 // loop_header_branch
      %22 = sbr.rel (%p20) target = $region8
    $region5: #{tpu_custom_call.1} parent=1 // loop_body
      %s24 = ssub.s32 %s19, 1
      %s25 = ssub.s32 %s19, 2
      %s26 = sadd.s32 %s19, 1
      %s27 = ssub.s32 %s19, %s26
      %p28 = scmp.eq.s32.totalorder %s27, 0
      %s30 = sadd.s32 %s29, 1
      %s31 = scalar_select %p28, %s29, %s30
      %p34 = pneg %p28
      %p35 = scmp.eq.s32.totalorder %s19, 1
      %p36 = por %p34, %p35
      %p37 = scmp.ne.s32.totalorder %s29, %s32
      %p38 = scmp.eq.s32.totalorder %s19, 0
      %p39 = por %p37, %p38
      %p40 = scmp.ne.s32.totalorder %s29, %s32
      %p41 = scmp.eq.s32.totalorder %s24, 1
      %p42 = por %p40, %p41
      %p43 = scmp.ne.s32.totalorder %s32, %s33
      %p44 = scmp.eq.s32.totalorder %s24, 0
      %p45 = por %p43, %p44
      %p46 = scmp.ne.s32.totalorder %s32, %s33
      %p47 = scmp.eq.s32.totalorder %s25, 1
      %p48 = por %p46, %p47
      %p50 = scmp.ne.s32.totalorder %s33, %s49
      %p51 = scmp.eq.s32.totalorder %s25, 0
      %p52 = por %p50, %p51
      %s54 = sadd.s32 %s53, 1
      %p57 = scmp.eq.s32.totalorder %s19, 1
      %p58 = scmp.ne.s32.totalorder %s53, %s55
      %p59 = scmp.eq.s32.totalorder %s19, 0
      %p60 = por %p58, %p59
      %p61 = scmp.ne.s32.totalorder %s53, %s55
      %p62 = scmp.eq.s32.totalorder %s24, 1
      %p63 = por %p61, %p62
      %p64 = scmp.ne.s32.totalorder %s55, %s56
      %p65 = scmp.eq.s32.totalorder %s24, 0
      %p66 = por %p64, %p65
      %p67 = scmp.ne.s32.totalorder %s55, %s56
      %p68 = scmp.eq.s32.totalorder %s25, 1
      %p69 = por %p67, %p68
      %p71 = scmp.ne.s32.totalorder %s56, %s70
      %p72 = scmp.eq.s32.totalorder %s25, 0
      %p73 = por %p71, %p72
      %s75 = sadd.s32 %s74, 1
      %p78 = scmp.eq.s32.totalorder %s19, 1
      %p79 = scmp.ne.s32.totalorder %s74, %s76
      %p80 = scmp.eq.s32.totalorder %s19, 0
      %p81 = por %p79, %p80
      %p82 = scmp.ne.s32.totalorder %s74, %s76
      %p83 = scmp.eq.s32.totalorder %s24, 1
      %p84 = por %p82, %p83
      %p85 = scmp.ne.s32.totalorder %s76, %s77
      %p86 = scmp.eq.s32.totalorder %s24, 0
      %p87 = por %p85, %p86
      %p88 = scmp.ne.s32.totalorder %s76, %s77
      %p89 = scmp.eq.s32.totalorder %s25, 1
      %p90 = por %p88, %p89
      %p92 = scmp.ne.s32.totalorder %s77, %s91
      %p93 = scmp.eq.s32.totalorder %s25, 0
      %p94 = por %p92, %p93
      %s96 = sadd.s32 %s95, 1
      %p99 = scmp.eq.s32.totalorder %s19, 1
      %p100 = scmp.ne.s32.totalorder %s95, %s97
      %p101 = scmp.eq.s32.totalorder %s19, 0
      %p102 = por %p100, %p101
      %p103 = scmp.ne.s32.totalorder %s95, %s97
      %p104 = scmp.eq.s32.totalorder %s24, 1
      %p105 = por %p103, %p104
      %p106 = scmp.ne.s32.totalorder %s97, %s98
      %p107 = scmp.eq.s32.totalorder %s24, 0
      %p108 = por %p106, %p107
      %p109 = scmp.ne.s32.totalorder %s97, %s98
      %p110 = scmp.eq.s32.totalorder %s25, 1
      %p111 = por %p109, %p110
      %p113 = scmp.ne.s32.totalorder %s98, %s112
      %p114 = scmp.eq.s32.totalorder %s25, 0
      %p115 = por %p113, %p114
      %s117 = sadd.s32 %s116, 1
      %p120 = scmp.eq.s32.totalorder %s19, 1
      %p121 = scmp.ne.s32.totalorder %s116, %s118
      %p122 = scmp.eq.s32.totalorder %s19, 0
      %p123 = por %p121, %p122
      %p124 = scmp.ne.s32.totalorder %s116, %s118
      %p125 = scmp.eq.s32.totalorder %s24, 1
      %p126 = por %p124, %p125
      %p127 = scmp.ne.s32.totalorder %s118, %s119
      %p128 = scmp.eq.s32.totalorder %s24, 0
      %p129 = por %p127, %p128
      %p130 = scmp.ne.s32.totalorder %s118, %s119
      %p131 = scmp.eq.s32.totalorder %s25, 1
      %p132 = por %p130, %p131
      %p134 = scmp.ne.s32.totalorder %s119, %s133
      %p135 = scmp.eq.s32.totalorder %s25, 0
      %p136 = por %p134, %p135
      %s137 = ssub.s32 %s19, %s26
      %p138 = scmp.eq.s32.totalorder %s137, 0
      %s140 = sadd.s32 %s139, 1
      %s141 = scalar_select %p138, %s139, %s140
      %p144 = pneg %p138
      %p145 = scmp.eq.s32.totalorder %s19, 1
      %p146 = por %p144, %p145
      %p147 = scmp.ne.s32.totalorder %s139, %s142
      %p148 = scmp.eq.s32.totalorder %s19, 0
      %p149 = por %p147, %p148
      %p150 = scmp.ne.s32.totalorder %s139, %s142
      %p151 = scmp.eq.s32.totalorder %s24, 1
      %p152 = por %p150, %p151
      %p153 = scmp.ne.s32.totalorder %s142, %s143
      %p154 = scmp.eq.s32.totalorder %s24, 0
      %p155 = por %p153, %p154
      %p156 = scmp.ne.s32.totalorder %s142, %s143
      %p157 = scmp.eq.s32.totalorder %s25, 1
      %p158 = por %p156, %p157
      %p160 = scmp.ne.s32.totalorder %s143, %s159
      %p161 = scmp.eq.s32.totalorder %s25, 0
      %p162 = por %p160, %p161
      %s163 = ssub.s32 %s19, %s26
      %p164 = scmp.eq.s32.totalorder %s163, 0
      %s166 = sadd.s32 %s165, 1
      %s167 = scalar_select %p164, %s165, %s166
      %p170 = pneg %p164
      %p171 = scmp.eq.s32.totalorder %s19, 1
      %p172 = por %p170, %p171
      %p173 = scmp.ne.s32.totalorder %s165, %s168
      %p174 = scmp.eq.s32.totalorder %s19, 0
      %p175 = por %p173, %p174
      %p176 = scmp.ne.s32.totalorder %s165, %s168
      %p177 = scmp.eq.s32.totalorder %s24, 1
      %p178 = por %p176, %p177
      %p179 = scmp.ne.s32.totalorder %s168, %s169
      %p180 = scmp.eq.s32.totalorder %s24, 0
      %p181 = por %p179, %p180
      %p182 = scmp.ne.s32.totalorder %s168, %s169
      %p183 = scmp.eq.s32.totalorder %s25, 1
      %p184 = por %p182, %p183
      %p186 = scmp.ne.s32.totalorder %s169, %s185
      %p187 = scmp.eq.s32.totalorder %s25, 0
      %p188 = por %p186, %p187
      %s189 = ssub.s32 %s19, %s26
      %p190 = scmp.eq.s32.totalorder %s189, 0
      %s192 = sadd.s32 %s191, 1
      %s193 = scalar_select %p190, %s191, %s192
      %p196 = pneg %p190
      %p197 = scmp.eq.s32.totalorder %s19, 1
      %p198 = por %p196, %p197
      %p199 = scmp.ne.s32.totalorder %s191, %s194
      %p200 = scmp.eq.s32.totalorder %s19, 0
      %p201 = por %p199, %p200
      %p202 = scmp.ne.s32.totalorder %s191, %s194
      %p203 = scmp.eq.s32.totalorder %s24, 1
      %p204 = por %p202, %p203
      %p205 = scmp.ne.s32.totalorder %s194, %s195
      %p206 = scmp.eq.s32.totalorder %s24, 0
      %p207 = por %p205, %p206
      %p208 = scmp.ne.s32.totalorder %s194, %s195
      %p209 = scmp.eq.s32.totalorder %s25, 1
      %p210 = por %p208, %p209
      %p212 = scmp.ne.s32.totalorder %s195, %s211
      %p213 = scmp.eq.s32.totalorder %s25, 0
      %p214 = por %p212, %p213
      %p215 = scmp.le.s32.totalorder 1, %s19
      %p216 = scmp.lt.s32.totalorder %s19, 3
      %p217 = pnand %p215, %p216
      %p218 = pneg %p217
      // Predicated region
      $region9: #{tpu_custom_call.1} parent=5 // pred_check
        _
      $region10: #{tpu_custom_call.1} parent=5 // pred_check_branch
        %220 = sbr.rel (%p217) target = $region12
      $region11: #{tpu_custom_call.1} parent=5 // pred_region
        %s221 = ssub.s32 %s19, 1
        // Predicated region
        $region13: #{tpu_custom_call.1} parent=11 // pred_check
          %p222 = pneg %p66
        $region14: #{tpu_custom_call.1} parent=11 // pred_check_branch
          %224 = sbr.rel (%p222) target = $region16
        $region15: #{tpu_custom_call.1} parent=11 // pred_region
          %s226 = ssub.s32 1024, 1024
          %227 = vsyncadd [#allocation3], %s226
          %s228 = sshll.u32 [#allocation2], 4
          %s229 = int_to_ptr.vmem [resolvable:$true] %s228
          %234 = dma.hbm_to_vmem [thread:$0]  %s1, 1024, %s229, [#allocation3], 64, 64, 4
        $region16: #{tpu_custom_call.1} parent=11 // pred_fallthru
          _
        // Predicated region
        $region17: #{tpu_custom_call.1} parent=11 // pred_check
          %p235 = pneg %p87
        $region18: #{tpu_custom_call.1} parent=11 // pred_check_branch
          %237 = sbr.rel (%p235) target = $region20
        $region19: #{tpu_custom_call.1} parent=11 // pred_region
          _
        $region20: #{tpu_custom_call.1} parent=11 // pred_fallthru
          _
        // Predicated region
        $region21: #{tpu_custom_call.1} parent=11 // pred_check
          %p238 = pneg %p108
        $region22: #{tpu_custom_call.1} parent=11 // pred_check_branch
          %240 = sbr.rel (%p238) target = $region24
        $region23: #{tpu_custom_call.1} parent=11 // pred_region
          %s242 = ssub.s32 1024, 1024
          %243 = vsyncadd [#allocation6], %s242
          %s244 = sshll.u32 [#allocation5], 4
          %s245 = int_to_ptr.vmem [resolvable:$true] %s244
          %250 = dma.hbm_to_vmem [thread:$0]  %s3, 1024, %s245, [#allocation6], 64, 64, 4
        $region24: #{tpu_custom_call.1} parent=11 // pred_fallthru
          _
        // Predicated region
        $region25: #{tpu_custom_call.1} parent=11 // pred_check
          %p251 = pneg %p129
        $region26: #{tpu_custom_call.1} parent=11 // pred_check_branch
          %253 = sbr.rel (%p251) target = $region28
        $region27: #{tpu_custom_call.1} parent=11 // pred_region
          _
        $region28: #{tpu_custom_call.1} parent=11 // pred_fallthru
          _
      $region12: #{tpu_custom_call.1} parent=5 // pred_fallthru
        _
      %p254 = scmp.lt.s32.totalorder %s19, 2
      // Predicated region
      $region29: #{tpu_custom_call.1} parent=5 // pred_check
        %p255 = pneg %p254
      $region30: #{tpu_custom_call.1} parent=5 // pred_check_branch
        %257 = sbr.rel (%p255) target = $region32
      $region31: #{tpu_custom_call.1} parent=5 // pred_region
        // Predicated region
        $region33: #{tpu_custom_call.1} parent=31 // pred_check
          %p258 = pneg %p39
        $region34: #{tpu_custom_call.1} parent=31 // pred_check_branch
          %260 = sbr.rel (%p258) target = $region36
        $region35: #{tpu_custom_call.1} parent=31 // pred_region
          %s261 = smul.u32 32, %s19
          %p262 = scmp.lt.s32.totalorder %s261, 63
          %s263 = scalar_select %p262, %s261, 63
          %s264 = smul.addr %s263, 8
          %s265 = scalar_lea.vmem %s0, %s264
          %s266 = smul.u32 32, %s19
        $region36: #{tpu_custom_call.1} parent=31 // pred_fallthru
          _
        // Predicated region
        $region37: #{tpu_custom_call.1} parent=31 // pred_check
          %p267 = pneg %p149
        $region38: #{tpu_custom_call.1} parent=31 // pred_check_branch
          %269 = sbr.rel (%p267) target = $region40
        $region39: #{tpu_custom_call.1} parent=31 // pred_region
          %s270 = smul.u32 32, %s19
          %p271 = scmp.lt.s32.totalorder %s270, 63
          %s272 = scalar_select %p271, %s270, 63
          %s273 = smul.addr %s272, 8
          %s274 = scalar_lea.vmem %s5, %s273
          %s275 = smul.u32 32, %s19
        $region40: #{tpu_custom_call.1} parent=31 // pred_fallthru
          _
      $region32: #{tpu_custom_call.1} parent=5 // pred_fallthru
        _
      %p276 = scmp.le.s32.totalorder 1, %s19
      %p277 = scmp.lt.s32.totalorder %s19, 3
      %p278 = pnand %p276, %p277
      %p279 = pneg %p278
      // Predicated region
      $region41: #{tpu_custom_call.1} parent=5 // pred_check
        _
      $region42: #{tpu_custom_call.1} parent=5 // pred_check_branch
        %281 = sbr.rel (%p278) target = $region44
      $region43: #{tpu_custom_call.1} parent=5 // pred_region
        %s282 = ssub.s32 %s19, 1
        // Predicated region
        $region45: #{tpu_custom_call.1} parent=43 // pred_check
          %p283 = pneg %p66
        $region46: #{tpu_custom_call.1} parent=43 // pred_check_branch
          %285 = sbr.rel (%p283) target = $region48
        $region47: #{tpu_custom_call.1} parent=43 // pred_region
          %286 = dma.done [#allocation3], 1024
        $region48: #{tpu_custom_call.1} parent=43 // pred_fallthru
          _
        // Predicated region
        $region49: #{tpu_custom_call.1} parent=43 // pred_check
          %p287 = pneg %p108
        $region50: #{tpu_custom_call.1} parent=43 // pred_check_branch
          %289 = sbr.rel (%p287) target = $region52
        $region51: #{tpu_custom_call.1} parent=43 // pred_region
          %290 = dma.done [#allocation6], 1024
        $region52: #{tpu_custom_call.1} parent=43 // pred_fallthru
          _
        %s291 = smul.u32 32, %s24
        %p292 = scmp.lt.s32.totalorder %s291, 63
        %s293 = scalar_select %p292, %s291, 63
        %s294 = smul.addr %s293, 8
        %s295 = scalar_lea.vmem %s0, %s294
        %p296 = pneg %p45
        %p297 = pneg %p42
        %p298 = pneg %p66
        %p299 = pneg %p63
        %p300 = pneg %p87
        %p301 = pneg %p84
        %p302 = pneg %p108
        %p303 = pneg %p105
        %p304 = pneg %p129
        %p305 = pneg %p126
        %s306 = smul.u32 32, %s24
        %p307 = scmp.lt.s32.totalorder %s306, 63
        %s308 = scalar_select %p307, %s306, 63
        %s309 = smul.addr %s308, 8
        %s310 = scalar_lea.vmem %s5, %s309
        %p311 = pneg %p155
        %p312 = pneg %p152
        %p313 = pneg %p181
        %p314 = pneg %p178
        %s315 = sand.u32 %s168, 1
        %s316 = scalar_lea.sflag [#allocation4], %s315
        %s317 = sand.u32 %s168, 1
        %s318 = smul.addr %s317, 256
        %s319 = scalar_lea.vmem [#allocation7], %s318
        %p320 = pneg %p207
        %p321 = pneg %p204
        %s322 = smul.u32 32, %s24
        %p323 = scmp.lt.s32.totalorder %s322, 63
        %s324 = scalar_select %p323, %s322, 63
        %s325 = smul.addr %s324, 8
        %s326 = scalar_lea.vmem %s7, %s325
        %s327 = smul.u32 32, %s24
        %p328 = scmp.lt.s32.totalorder %s327, 63
        %s329 = scalar_select %p328, %s327, 63
        %s330 = smul.addr %s329, 8
        %s331 = scalar_lea.vmem %s0, %s330
        %s332 = smul.u32 32, %s24
        %s333 = smul.u32 32, %s24
        %p334 = scmp.lt.s32.totalorder %s333, 63
        %s335 = scalar_select %p334, %s333, 63
        %s336 = smul.addr %s335, 8
        %s337 = scalar_lea.vmem %s5, %s336
        %s338 = smul.u32 32, %s24
        %s339 = smul.u32 32, %s24
        %s340 = smul.u32 32, %s24
        %p341 = scmp.lt.s32.totalorder %s340, 63
        %s342 = scalar_select %p341, %s340, 63
        %s343 = smul.addr %s342, 8
        %s344 = scalar_lea.vmem %s7, %s343
        %s345 = smul.u32 32, %s24
        %v347 = vld [vmem:[%s331] sm:$0xff]
        %v348 = vld [vmem:[%s331 + $0x8] sm:$0xff]
        %v349 = vld [vmem:[%s331 + $0x10] sm:$0xff]
        %v350 = vld [vmem:[%s331 + $0x18] sm:$0xff]
        %v351 = vld [vmem:[%s331 + $0x20] sm:$0xff]
        %v352 = vld [vmem:[%s331 + $0x28] sm:$0xff]
        %v353 = vld [vmem:[%s331 + $0x30] sm:$0xff]
        %v354 = vld [vmem:[%s331 + $0x38] sm:$0xff]
        %v355 = vld [vmem:[%s331 + $0x40] sm:$0xff]
        %v356 = vld [vmem:[%s331 + $0x48] sm:$0xff]
        %v357 = vld [vmem:[%s331 + $0x50] sm:$0xff]
        %v358 = vld [vmem:[%s331 + $0x58] sm:$0xff]
        %v359 = vld [vmem:[%s331 + $0x60] sm:$0xff]
        %v360 = vld [vmem:[%s331 + $0x68] sm:$0xff]
        %v361 = vld [vmem:[%s331 + $0x70] sm:$0xff]
        %v362 = vld [vmem:[%s331 + $0x78] sm:$0xff]
        %v363 = vld [vmem:[%s331 + $0x80] sm:$0xff]
        %v364 = vld [vmem:[%s331 + $0x88] sm:$0xff]
        %v365 = vld [vmem:[%s331 + $0x90] sm:$0xff]
        %v366 = vld [vmem:[%s331 + $0x98] sm:$0xff]
        %v367 = vld [vmem:[%s331 + $0xa0] sm:$0xff]
        %v368 = vld [vmem:[%s331 + $0xa8] sm:$0xff]
        %v369 = vld [vmem:[%s331 + $0xb0] sm:$0xff]
        %v370 = vld [vmem:[%s331 + $0xb8] sm:$0xff]
        %v371 = vld [vmem:[%s331 + $0xc0] sm:$0xff]
        %v372 = vld [vmem:[%s331 + $0xc8] sm:$0xff]
        %v373 = vld [vmem:[%s331 + $0xd0] sm:$0xff]
        %v374 = vld [vmem:[%s331 + $0xd8] sm:$0xff]
        %v375 = vld [vmem:[%s331 + $0xe0] sm:$0xff]
        %v376 = vld [vmem:[%s331 + $0xe8] sm:$0xff]
        %v377 = vld [vmem:[%s331 + $0xf0] sm:$0xff]
        %v378 = vld [vmem:[%s331 + $0xf8] sm:$0xff]
        %v379 = vpack.c.bf16 %v348, %v347
        %v380 = vpack.c.bf16 %v350, %v349
        %v381 = vpack.c.bf16 %v352, %v351
        %v382 = vpack.c.bf16 %v354, %v353
        %v383 = vpack.c.bf16 %v356, %v355
        %v384 = vpack.c.bf16 %v358, %v357
        %v385 = vpack.c.bf16 %v360, %v359
        %v386 = vpack.c.bf16 %v362, %v361
        %v387 = vpack.c.bf16 %v364, %v363
        %v388 = vpack.c.bf16 %v366, %v365
        %v389 = vpack.c.bf16 %v368, %v367
        %v390 = vpack.c.bf16 %v370, %v369
        %v391 = vpack.c.bf16 %v372, %v371
        %v392 = vpack.c.bf16 %v374, %v373
        %v393 = vpack.c.bf16 %v376, %v375
        %v394 = vpack.c.bf16 %v378, %v377
        %v395 = vld [vmem:[#allocation2] sm:$0xf]
        %v396 = vld [vmem:[#allocation2 + $0x4] sm:$0xf]
        %v397 = vld [vmem:[#allocation2 + $0x8] sm:$0xf]
        %v398 = vld [vmem:[#allocation2 + $0xc] sm:$0xf]
        %v399 = vld [vmem:[#allocation2 + $0x10] sm:$0xf]
        %v400 = vld [vmem:[#allocation2 + $0x14] sm:$0xf]
        %v401 = vld [vmem:[#allocation2 + $0x18] sm:$0xf]
        %v402 = vld [vmem:[#allocation2 + $0x1c] sm:$0xf]
        %v403 = vld [vmem:[#allocation2 + $0x20] sm:$0xf]
        %v404 = vld [vmem:[#allocation2 + $0x24] sm:$0xf]
        %v405 = vld [vmem:[#allocation2 + $0x28] sm:$0xf]
        %v406 = vld [vmem:[#allocation2 + $0x2c] sm:$0xf]
        %v407 = vld [vmem:[#allocation2 + $0x30] sm:$0xf]
        %v408 = vld [vmem:[#allocation2 + $0x34] sm:$0xf]
        %v409 = vld [vmem:[#allocation2 + $0x38] sm:$0xf]
        %v410 = vld [vmem:[#allocation2 + $0x3c] sm:$0xf]
        %v411 = vld [vmem:[%s2] sm:$0x1]
        %v413 = vlaneseq
        %v414 = vshrl.u32 %v413, 7
        %v415 = vsub.s32 0, %v414
        %v416 = vrot.slane %v411, %v415
        %v434 = vunpack.c.l.b16 %v395
        %v435 = vunpack.c.l.b16 %v396
        %v436 = vunpack.c.l.b16 %v397
        %v437 = vunpack.c.l.b16 %v398
        %v438 = vunpack.c.l.b16 %v399
        %v439 = vunpack.c.l.b16 %v400
        %v440 = vunpack.c.l.b16 %v401
        %v441 = vunpack.c.l.b16 %v402
        %v442 = vunpack.c.l.b16 %v403
        %v443 = vunpack.c.l.b16 %v404
        %v444 = vunpack.c.l.b16 %v405
        %v445 = vunpack.c.l.b16 %v406
        %v446 = vunpack.c.l.b16 %v407
        %v447 = vunpack.c.l.b16 %v408
        %v448 = vunpack.c.l.b16 %v409
        %v449 = vunpack.c.l.b16 %v410
        %v450 = vpack.c.b16 %v435, %v434
        %v451 = vpack.c.b16 %v437, %v436
        %v452 = vpack.c.b16 %v439, %v438
        %v453 = vpack.c.b16 %v441, %v440
        %v454 = vpack.c.b16 %v443, %v442
        %v455 = vpack.c.b16 %v445, %v444
        %v456 = vpack.c.b16 %v447, %v446
        %v457 = vpack.c.b16 %v449, %v448
        %466 = vmatprep.subr.bf16.mxu0 0
        %467 = vmatpush1.bf16.msra.mxu0 %v457
        %468 = vmatprep.subr.bf16.mxu0 0
        %469 = vmatpush1.bf16.msra.mxu0 %v456
        %470 = vmatprep.subr.bf16.mxu0 0
        %471 = vmatpush1.bf16.msra.mxu0 %v455
        %472 = vmatprep.subr.bf16.mxu0 0
        %473 = vmatpush1.bf16.msra.mxu0 %v454
        %474 = vmatprep.subr.bf16.mxu0 0
        %475 = vmatpush1.bf16.msra.mxu0 %v453
        %476 = vmatprep.subr.bf16.mxu0 0
        %477 = vmatpush1.bf16.msra.mxu0 %v452
        %478 = vmatprep.subr.bf16.mxu0 0
        %479 = vmatpush1.bf16.msra.mxu0 %v451
        %480 = vmatprep.subr.bf16.mxu0 0
        %481 = vmatpush1.bf16.msra.mxu0 %v450
        %482 = vmatprep.subr.bf16.mxu0 0
        %483 = vmatpush2.bf16.msra.mxu0 0
        %484 = vmatprep.subr.bf16.mxu0 0
        %485 = vmatpush2.bf16.msra.mxu0 0
        %486 = vmatprep.subr.bf16.mxu0 0
        %487 = vmatpush2.bf16.msra.mxu0 0
        %488 = vmatprep.subr.bf16.mxu0 0
        %489 = vmatpush2.bf16.msra.mxu0 0
        %490 = vmatprep.subr.bf16.mxu0 0
        %491 = vmatpush2.bf16.msra.mxu0 0
        %492 = vmatprep.subr.bf16.mxu0 0
        %493 = vmatpush2.bf16.msra.mxu0 0
        %494 = vmatprep.subr.bf16.mxu0 0
        %495 = vmatpush2.bf16.msra.mxu0 0
        %496 = vmatprep.subr.bf16.mxu0 0
        %497 = vmatpush2.bf16.msra.mxu0 0
        %498 = vmatprep.mubr.bf16.mxu0 0
        %499 = vmatmul.mubr.bf16.gmra.mxu0 %v379
        %v500 = vpop.f32.mrf.mxu0
        %v501 = vadd.f32 %v416, %v500
        %v502 = vpop.f32.mrf.mxu0
        %v503 = vpop.f32.mrf.mxu0
        %v504 = vadd.f32 %v416, %v503
        %v505 = vpop.f32.mrf.mxu0
        %506 = vmatprep.mubr.bf16.mxu0 0
        %507 = vmatmul.mubr.bf16.gmra.mxu0 %v380
        %v508 = vpop.f32.mrf.mxu0
        %v509 = vadd.f32 %v416, %v508
        %v510 = vpop.f32.mrf.mxu0
        %v511 = vpop.f32.mrf.mxu0
        %v512 = vadd.f32 %v416, %v511
        %v513 = vpop.f32.mrf.mxu0
        %514 = vmatprep.mubr.bf16.mxu0 0
        %515 = vmatmul.mubr.bf16.gmra.mxu0 %v381
        %v516 = vpop.f32.mrf.mxu0
        %v517 = vadd.f32 %v416, %v516
        %v518 = vpop.f32.mrf.mxu0
        %v519 = vpop.f32.mrf.mxu0
        %v520 = vadd.f32 %v416, %v519
        %v521 = vpop.f32.mrf.mxu0
        %522 = vmatprep.mubr.bf16.mxu0 0
        %523 = vmatmul.mubr.bf16.gmra.mxu0 %v382
        %v524 = vpop.f32.mrf.mxu0
        %v525 = vadd.f32 %v416, %v524
        %v526 = vpop.f32.mrf.mxu0
        %v527 = vpop.f32.mrf.mxu0
        %v528 = vadd.f32 %v416, %v527
        %v529 = vpop.f32.mrf.mxu0
        %530 = vmatprep.mubr.bf16.mxu0 0
        %531 = vmatmul.mubr.bf16.gmra.mxu0 %v383
        %v532 = vpop.f32.mrf.mxu0
        %v533 = vadd.f32 %v416, %v532
        %v534 = vpop.f32.mrf.mxu0
        %v535 = vpop.f32.mrf.mxu0
        %v536 = vadd.f32 %v416, %v535
        %v537 = vpop.f32.mrf.mxu0
        %538 = vmatprep.mubr.bf16.mxu0 0
        %539 = vmatmul.mubr.bf16.gmra.mxu0 %v384
        %v540 = vpop.f32.mrf.mxu0
        %v541 = vadd.f32 %v416, %v540
        %v542 = vpop.f32.mrf.mxu0
        %v543 = vpop.f32.mrf.mxu0
        %v544 = vadd.f32 %v416, %v543
        %v545 = vpop.f32.mrf.mxu0
        %546 = vmatprep.mubr.bf16.mxu0 0
        %547 = vmatmul.mubr.bf16.gmra.mxu0 %v385
        %v548 = vpop.f32.mrf.mxu0
        %v549 = vadd.f32 %v416, %v548
        %v550 = vpop.f32.mrf.mxu0
        %v551 = vpop.f32.mrf.mxu0
        %v552 = vadd.f32 %v416, %v551
        %v553 = vpop.f32.mrf.mxu0
        %554 = vmatprep.mubr.bf16.mxu0 0
        %555 = vmatmul.mubr.bf16.gmra.mxu0 %v386
        %v556 = vpop.f32.mrf.mxu0
        %v557 = vadd.f32 %v416, %v556
        %v558 = vpop.f32.mrf.mxu0
        %v559 = vpop.f32.mrf.mxu0
        %v560 = vadd.f32 %v416, %v559
        %v561 = vpop.f32.mrf.mxu0
        %562 = vmatprep.mubr.bf16.mxu0 0
        %563 = vmatmul.mubr.bf16.gmra.mxu0 %v387
        %v564 = vpop.f32.mrf.mxu0
        %v565 = vadd.f32 %v416, %v564
        %v566 = vpop.f32.mrf.mxu0
        %v567 = vpop.f32.mrf.mxu0
        %v568 = vadd.f32 %v416, %v567
        %v569 = vpop.f32.mrf.mxu0
        %570 = vmatprep.mubr.bf16.mxu0 0
        %571 = vmatmul.mubr.bf16.gmra.mxu0 %v388
        %v572 = vpop.f32.mrf.mxu0
        %v573 = vadd.f32 %v416, %v572
        %v574 = vpop.f32.mrf.mxu0
        %v575 = vpop.f32.mrf.mxu0
        %v576 = vadd.f32 %v416, %v575
        %v577 = vpop.f32.mrf.mxu0
        %578 = vmatprep.mubr.bf16.mxu0 0
        %579 = vmatmul.mubr.bf16.gmra.mxu0 %v389
        %v580 = vpop.f32.mrf.mxu0
        %v581 = vadd.f32 %v416, %v580
        %v582 = vpop.f32.mrf.mxu0
        %v583 = vpop.f32.mrf.mxu0
        %v584 = vadd.f32 %v416, %v583
        %v585 = vpop.f32.mrf.mxu0
        %586 = vmatprep.mubr.bf16.mxu0 0
        %587 = vmatmul.mubr.bf16.gmra.mxu0 %v390
        %v588 = vpop.f32.mrf.mxu0
        %v589 = vadd.f32 %v416, %v588
        %v590 = vpop.f32.mrf.mxu0
        %v591 = vpop.f32.mrf.mxu0
        %v592 = vadd.f32 %v416, %v591
        %v593 = vpop.f32.mrf.mxu0
        %594 = vmatprep.mubr.bf16.mxu0 0
        %595 = vmatmul.mubr.bf16.gmra.mxu0 %v391
        %v596 = vpop.f32.mrf.mxu0
        %v597 = vadd.f32 %v416, %v596
        %v598 = vpop.f32.mrf.mxu0
        %v599 = vpop.f32.mrf.mxu0
        %v600 = vadd.f32 %v416, %v599
        %v601 = vpop.f32.mrf.mxu0
        %602 = vmatprep.mubr.bf16.mxu0 0
        %603 = vmatmul.mubr.bf16.gmra.mxu0 %v392
        %v604 = vpop.f32.mrf.mxu0
        %v605 = vadd.f32 %v416, %v604
        %v606 = vpop.f32.mrf.mxu0
        %v607 = vpop.f32.mrf.mxu0
        %v608 = vadd.f32 %v416, %v607
        %v609 = vpop.f32.mrf.mxu0
        %610 = vmatprep.mubr.bf16.mxu0 0
        %611 = vmatmul.mubr.bf16.gmra.mxu0 %v393
        %v612 = vpop.f32.mrf.mxu0
        %v613 = vadd.f32 %v416, %v612
        %v614 = vpop.f32.mrf.mxu0
        %v615 = vpop.f32.mrf.mxu0
        %v616 = vadd.f32 %v416, %v615
        %v617 = vpop.f32.mrf.mxu0
        %618 = vmatprep.mubr.bf16.mxu0 0
        %619 = vmatmul.mubr.bf16.gmra.mxu0 %v394
        %v620 = vpop.f32.mrf.mxu0
        %v621 = vadd.f32 %v416, %v620
        %v622 = vpop.f32.mrf.mxu0
        %v623 = vpop.f32.mrf.mxu0
        %v624 = vadd.f32 %v416, %v623
        %v625 = vpop.f32.mrf.mxu0
        %626 = vdwg.mxu0
        %v627 = vmax.f32 %v501, 0.0
        %v628 = vmax.f32 %v504, 0.0
        %v629 = vmax.f32 %v509, 0.0
        %v630 = vmax.f32 %v512, 0.0
        %v631 = vmax.f32 %v517, 0.0
        %v632 = vmax.f32 %v520, 0.0
        %v633 = vmax.f32 %v525, 0.0
        %v634 = vmax.f32 %v528, 0.0
        %v635 = vmax.f32 %v533, 0.0
        %v636 = vmax.f32 %v536, 0.0
        %v637 = vmax.f32 %v541, 0.0
        %v638 = vmax.f32 %v544, 0.0
        %v639 = vmax.f32 %v549, 0.0
        %v640 = vmax.f32 %v552, 0.0
        %v641 = vmax.f32 %v557, 0.0
        %v642 = vmax.f32 %v560, 0.0
        %v643 = vmax.f32 %v565, 0.0
        %v644 = vmax.f32 %v568, 0.0
        %v645 = vmax.f32 %v573, 0.0
        %v646 = vmax.f32 %v576, 0.0
        %v647 = vmax.f32 %v581, 0.0
        %v648 = vmax.f32 %v584, 0.0
        %v649 = vmax.f32 %v589, 0.0
        %v650 = vmax.f32 %v592, 0.0
        %v651 = vmax.f32 %v597, 0.0
        %v652 = vmax.f32 %v600, 0.0
        %v653 = vmax.f32 %v605, 0.0
        %v654 = vmax.f32 %v608, 0.0
        %v655 = vmax.f32 %v613, 0.0
        %v656 = vmax.f32 %v616, 0.0
        %v657 = vmax.f32 %v621, 0.0
        %v658 = vmax.f32 %v624, 0.0
        %v659 = vpack.c.bf16 %v628, %v627
        %v660 = vpack.c.bf16 %v630, %v629
        %v661 = vpack.c.bf16 %v632, %v631
        %v662 = vpack.c.bf16 %v634, %v633
        %v663 = vpack.c.bf16 %v636, %v635
        %v664 = vpack.c.bf16 %v638, %v637
        %v665 = vpack.c.bf16 %v640, %v639
        %v666 = vpack.c.bf16 %v642, %v641
        %v667 = vpack.c.bf16 %v644, %v643
        %v668 = vpack.c.bf16 %v646, %v645
        %v669 = vpack.c.bf16 %v648, %v647
        %v670 = vpack.c.bf16 %v650, %v649
        %v671 = vpack.c.bf16 %v652, %v651
        %v672 = vpack.c.bf16 %v654, %v653
        %v673 = vpack.c.bf16 %v656, %v655
        %v674 = vpack.c.bf16 %v658, %v657
        %v675 = vld [vmem:[#allocation5] sm:$0xf]
        %v676 = vld [vmem:[#allocation5 + $0x4] sm:$0xf]
        %v677 = vld [vmem:[#allocation5 + $0x8] sm:$0xf]
        %v678 = vld [vmem:[#allocation5 + $0xc] sm:$0xf]
        %v679 = vld [vmem:[#allocation5 + $0x10] sm:$0xf]
        %v680 = vld [vmem:[#allocation5 + $0x14] sm:$0xf]
        %v681 = vld [vmem:[#allocation5 + $0x18] sm:$0xf]
        %v682 = vld [vmem:[#allocation5 + $0x1c] sm:$0xf]
        %v683 = vld [vmem:[#allocation5 + $0x20] sm:$0xf]
        %v684 = vld [vmem:[#allocation5 + $0x24] sm:$0xf]
        %v685 = vld [vmem:[#allocation5 + $0x28] sm:$0xf]
        %v686 = vld [vmem:[#allocation5 + $0x2c] sm:$0xf]
        %v687 = vld [vmem:[#allocation5 + $0x30] sm:$0xf]
        %v688 = vld [vmem:[#allocation5 + $0x34] sm:$0xf]
        %v689 = vld [vmem:[#allocation5 + $0x38] sm:$0xf]
        %v690 = vld [vmem:[#allocation5 + $0x3c] sm:$0xf]
        %v691 = vld [vmem:[%s4] sm:$0x1]
        %v693 = vlaneseq
        %v694 = vshrl.u32 %v693, 7
        %v695 = vsub.s32 0, %v694
        %v696 = vrot.slane %v691, %v695
        %v714 = vunpack.c.l.b16 %v675
        %v715 = vunpack.c.l.b16 %v676
        %v716 = vunpack.c.l.b16 %v677
        %v717 = vunpack.c.l.b16 %v678
        %v718 = vunpack.c.l.b16 %v679
        %v719 = vunpack.c.l.b16 %v680
        %v720 = vunpack.c.l.b16 %v681
        %v721 = vunpack.c.l.b16 %v682
        %v722 = vunpack.c.l.b16 %v683
        %v723 = vunpack.c.l.b16 %v684
        %v724 = vunpack.c.l.b16 %v685
        %v725 = vunpack.c.l.b16 %v686
        %v726 = vunpack.c.l.b16 %v687
        %v727 = vunpack.c.l.b16 %v688
        %v728 = vunpack.c.l.b16 %v689
        %v729 = vunpack.c.l.b16 %v690
        %v730 = vpack.c.b16 %v715, %v714
        %v731 = vpack.c.b16 %v717, %v716
        %v732 = vpack.c.b16 %v719, %v718
        %v733 = vpack.c.b16 %v721, %v720
        %v734 = vpack.c.b16 %v723, %v722
        %v735 = vpack.c.b16 %v725, %v724
        %v736 = vpack.c.b16 %v727, %v726
        %v737 = vpack.c.b16 %v729, %v728
        %746 = vmatprep.subr.bf16.mxu0 0
        %747 = vmatpush1.bf16.msra.mxu0 %v737
        %748 = vmatprep.subr.bf16.mxu0 0
        %749 = vmatpush1.bf16.msra.mxu0 %v736
        %750 = vmatprep.subr.bf16.mxu0 0
        %751 = vmatpush1.bf16.msra.mxu0 %v735
        %752 = vmatprep.subr.bf16.mxu0 0
        %753 = vmatpush1.bf16.msra.mxu0 %v734
        %754 = vmatprep.subr.bf16.mxu0 0
        %755 = vmatpush1.bf16.msra.mxu0 %v733
        %756 = vmatprep.subr.bf16.mxu0 0
        %757 = vmatpush1.bf16.msra.mxu0 %v732
        %758 = vmatprep.subr.bf16.mxu0 0
        %759 = vmatpush1.bf16.msra.mxu0 %v731
        %760 = vmatprep.subr.bf16.mxu0 0
        %761 = vmatpush1.bf16.msra.mxu0 %v730
        %762 = vmatprep.subr.bf16.mxu0 0
        %763 = vmatpush2.bf16.msra.mxu0 0
        %764 = vmatprep.subr.bf16.mxu0 0
        %765 = vmatpush2.bf16.msra.mxu0 0
        %766 = vmatprep.subr.bf16.mxu0 0
        %767 = vmatpush2.bf16.msra.mxu0 0
        %768 = vmatprep.subr.bf16.mxu0 0
        %769 = vmatpush2.bf16.msra.mxu0 0
        %770 = vmatprep.subr.bf16.mxu0 0
        %771 = vmatpush2.bf16.msra.mxu0 0
        %772 = vmatprep.subr.bf16.mxu0 0
        %773 = vmatpush2.bf16.msra.mxu0 0
        %774 = vmatprep.subr.bf16.mxu0 0
        %775 = vmatpush2.bf16.msra.mxu0 0
        %776 = vmatprep.subr.bf16.mxu0 0
        %777 = vmatpush2.bf16.msra.mxu0 0
        %778 = vmatprep.mubr.bf16.mxu0 0
        %779 = vmatmul.mubr.bf16.gmra.mxu0 %v659
        %v780 = vpop.f32.mrf.mxu0
        %v781 = vadd.f32 %v696, %v780
        %v782 = vpop.f32.mrf.mxu0
        %v783 = vpop.f32.mrf.mxu0
        %v784 = vadd.f32 %v696, %v783
        %v785 = vpop.f32.mrf.mxu0
        %786 = vmatprep.mubr.bf16.mxu0 0
        %787 = vmatmul.mubr.bf16.gmra.mxu0 %v660
        %v788 = vpop.f32.mrf.mxu0
        %v789 = vadd.f32 %v696, %v788
        %v790 = vpop.f32.mrf.mxu0
        %v791 = vpop.f32.mrf.mxu0
        %v792 = vadd.f32 %v696, %v791
        %v793 = vpop.f32.mrf.mxu0
        %794 = vmatprep.mubr.bf16.mxu0 0
        %795 = vmatmul.mubr.bf16.gmra.mxu0 %v661
        %v796 = vpop.f32.mrf.mxu0
        %v797 = vadd.f32 %v696, %v796
        %v798 = vpop.f32.mrf.mxu0
        %v799 = vpop.f32.mrf.mxu0
        %v800 = vadd.f32 %v696, %v799
        %v801 = vpop.f32.mrf.mxu0
        %802 = vmatprep.mubr.bf16.mxu0 0
        %803 = vmatmul.mubr.bf16.gmra.mxu0 %v662
        %v804 = vpop.f32.mrf.mxu0
        %v805 = vadd.f32 %v696, %v804
        %v806 = vpop.f32.mrf.mxu0
        %v807 = vpop.f32.mrf.mxu0
        %v808 = vadd.f32 %v696, %v807
        %v809 = vpop.f32.mrf.mxu0
        %810 = vmatprep.mubr.bf16.mxu0 0
        %811 = vmatmul.mubr.bf16.gmra.mxu0 %v663
        %v812 = vpop.f32.mrf.mxu0
        %v813 = vadd.f32 %v696, %v812
        %v814 = vpop.f32.mrf.mxu0
        %v815 = vpop.f32.mrf.mxu0
        %v816 = vadd.f32 %v696, %v815
        %v817 = vpop.f32.mrf.mxu0
        %818 = vmatprep.mubr.bf16.mxu0 0
        %819 = vmatmul.mubr.bf16.gmra.mxu0 %v664
        %v820 = vpop.f32.mrf.mxu0
        %v821 = vadd.f32 %v696, %v820
        %v822 = vpop.f32.mrf.mxu0
        %v823 = vpop.f32.mrf.mxu0
        %v824 = vadd.f32 %v696, %v823
        %v825 = vpop.f32.mrf.mxu0
        %826 = vmatprep.mubr.bf16.mxu0 0
        %827 = vmatmul.mubr.bf16.gmra.mxu0 %v665
        %v828 = vpop.f32.mrf.mxu0
        %v829 = vadd.f32 %v696, %v828
        %v830 = vpop.f32.mrf.mxu0
        %v831 = vpop.f32.mrf.mxu0
        %v832 = vadd.f32 %v696, %v831
        %v833 = vpop.f32.mrf.mxu0
        %834 = vmatprep.mubr.bf16.mxu0 0
        %835 = vmatmul.mubr.bf16.gmra.mxu0 %v666
        %v836 = vpop.f32.mrf.mxu0
        %v837 = vadd.f32 %v696, %v836
        %v838 = vpop.f32.mrf.mxu0
        %v839 = vpop.f32.mrf.mxu0
        %v840 = vadd.f32 %v696, %v839
        %v841 = vpop.f32.mrf.mxu0
        %842 = vmatprep.mubr.bf16.mxu0 0
        %843 = vmatmul.mubr.bf16.gmra.mxu0 %v667
        %v844 = vpop.f32.mrf.mxu0
        %v845 = vadd.f32 %v696, %v844
        %v846 = vpop.f32.mrf.mxu0
        %v847 = vpop.f32.mrf.mxu0
        %v848 = vadd.f32 %v696, %v847
        %v849 = vpop.f32.mrf.mxu0
        %850 = vmatprep.mubr.bf16.mxu0 0
        %851 = vmatmul.mubr.bf16.gmra.mxu0 %v668
        %v852 = vpop.f32.mrf.mxu0
        %v853 = vadd.f32 %v696, %v852
        %v854 = vpop.f32.mrf.mxu0
        %v855 = vpop.f32.mrf.mxu0
        %v856 = vadd.f32 %v696, %v855
        %v857 = vpop.f32.mrf.mxu0
        %858 = vmatprep.mubr.bf16.mxu0 0
        %859 = vmatmul.mubr.bf16.gmra.mxu0 %v669
        %v860 = vpop.f32.mrf.mxu0
        %v861 = vadd.f32 %v696, %v860
        %v862 = vpop.f32.mrf.mxu0
        %v863 = vpop.f32.mrf.mxu0
        %v864 = vadd.f32 %v696, %v863
        %v865 = vpop.f32.mrf.mxu0
        %866 = vmatprep.mubr.bf16.mxu0 0
        %867 = vmatmul.mubr.bf16.gmra.mxu0 %v670
        %v868 = vpop.f32.mrf.mxu0
        %v869 = vadd.f32 %v696, %v868
        %v870 = vpop.f32.mrf.mxu0
        %v871 = vpop.f32.mrf.mxu0
        %v872 = vadd.f32 %v696, %v871
        %v873 = vpop.f32.mrf.mxu0
        %874 = vmatprep.mubr.bf16.mxu0 0
        %875 = vmatmul.mubr.bf16.gmra.mxu0 %v671
        %v876 = vpop.f32.mrf.mxu0
        %v877 = vadd.f32 %v696, %v876
        %v878 = vpop.f32.mrf.mxu0
        %v879 = vpop.f32.mrf.mxu0
        %v880 = vadd.f32 %v696, %v879
        %v881 = vpop.f32.mrf.mxu0
        %882 = vmatprep.mubr.bf16.mxu0 0
        %883 = vmatmul.mubr.bf16.gmra.mxu0 %v672
        %v884 = vpop.f32.mrf.mxu0
        %v885 = vadd.f32 %v696, %v884
        %v886 = vpop.f32.mrf.mxu0
        %v887 = vpop.f32.mrf.mxu0
        %v888 = vadd.f32 %v696, %v887
        %v889 = vpop.f32.mrf.mxu0
        %890 = vmatprep.mubr.bf16.mxu0 0
        %891 = vmatmul.mubr.bf16.gmra.mxu0 %v673
        %v892 = vpop.f32.mrf.mxu0
        %v893 = vadd.f32 %v696, %v892
        %v894 = vpop.f32.mrf.mxu0
        %v895 = vpop.f32.mrf.mxu0
        %v896 = vadd.f32 %v696, %v895
        %v897 = vpop.f32.mrf.mxu0
        %898 = vmatprep.mubr.bf16.mxu0 0
        %899 = vmatmul.mubr.bf16.gmra.mxu0 %v674
        %v900 = vpop.f32.mrf.mxu0
        %v901 = vadd.f32 %v696, %v900
        %v902 = vpop.f32.mrf.mxu0
        %v903 = vpop.f32.mrf.mxu0
        %v904 = vadd.f32 %v696, %v903
        %v905 = vpop.f32.mrf.mxu0
        %906 = vdwg.mxu0
        %907 = vst [vmem:[%s319] sm:$0xff] %v781
        %908 = vst [vmem:[%s319 + $0x8] sm:$0xff] %v784
        %909 = vst [vmem:[%s319 + $0x10] sm:$0xff] %v789
        %910 = vst [vmem:[%s319 + $0x18] sm:$0xff] %v792
        %911 = vst [vmem:[%s319 + $0x20] sm:$0xff] %v797
        %912 = vst [vmem:[%s319 + $0x28] sm:$0xff] %v800
        %913 = vst [vmem:[%s319 + $0x30] sm:$0xff] %v805
        %914 = vst [vmem:[%s319 + $0x38] sm:$0xff] %v808
        %915 = vst [vmem:[%s319 + $0x40] sm:$0xff] %v813
        %916 = vst [vmem:[%s319 + $0x48] sm:$0xff] %v816
        %917 = vst [vmem:[%s319 + $0x50] sm:$0xff] %v821
        %918 = vst [vmem:[%s319 + $0x58] sm:$0xff] %v824
        %919 = vst [vmem:[%s319 + $0x60] sm:$0xff] %v829
        %920 = vst [vmem:[%s319 + $0x68] sm:$0xff] %v832
        %921 = vst [vmem:[%s319 + $0x70] sm:$0xff] %v837
        %922 = vst [vmem:[%s319 + $0x78] sm:$0xff] %v840
        %923 = vst [vmem:[%s319 + $0x80] sm:$0xff] %v845
        %924 = vst [vmem:[%s319 + $0x88] sm:$0xff] %v848
        %925 = vst [vmem:[%s319 + $0x90] sm:$0xff] %v853
        %926 = vst [vmem:[%s319 + $0x98] sm:$0xff] %v856
        %927 = vst [vmem:[%s319 + $0xa0] sm:$0xff] %v861
        %928 = vst [vmem:[%s319 + $0xa8] sm:$0xff] %v864
        %929 = vst [vmem:[%s319 + $0xb0] sm:$0xff] %v869
        %930 = vst [vmem:[%s319 + $0xb8] sm:$0xff] %v872
        %931 = vst [vmem:[%s319 + $0xc0] sm:$0xff] %v877
        %932 = vst [vmem:[%s319 + $0xc8] sm:$0xff] %v880
        %933 = vst [vmem:[%s319 + $0xd0] sm:$0xff] %v885
        %934 = vst [vmem:[%s319 + $0xd8] sm:$0xff] %v888
        %935 = vst [vmem:[%s319 + $0xe0] sm:$0xff] %v893
        %936 = vst [vmem:[%s319 + $0xe8] sm:$0xff] %v896
        %937 = vst [vmem:[%s319 + $0xf0] sm:$0xff] %v901
        %938 = vst [vmem:[%s319 + $0xf8] sm:$0xff] %v904
        %939 = vmax.xlane.f32.xlu0 %v781
        %v940 = vpop.xlane.xlu0 %939
        %941 = vmax.xlane.f32.xlu0 %v784
        %v942 = vpop.xlane.xlu0 %941
        %943 = vmax.xlane.f32.xlu0 %v789
        %v944 = vpop.xlane.xlu0 %943
        %945 = vmax.xlane.f32.xlu0 %v792
        %v946 = vpop.xlane.xlu0 %945
        %947 = vmax.xlane.f32.xlu0 %v797
        %v948 = vpop.xlane.xlu0 %947
        %949 = vmax.xlane.f32.xlu0 %v800
        %v950 = vpop.xlane.xlu0 %949
        %951 = vmax.xlane.f32.xlu0 %v805
        %v952 = vpop.xlane.xlu0 %951
        %953 = vmax.xlane.f32.xlu0 %v808
        %v954 = vpop.xlane.xlu0 %953
        %955 = vmax.xlane.f32.xlu0 %v813
        %v956 = vpop.xlane.xlu0 %955
        %957 = vmax.xlane.f32.xlu0 %v816
        %v958 = vpop.xlane.xlu0 %957
        %959 = vmax.xlane.f32.xlu0 %v821
        %v960 = vpop.xlane.xlu0 %959
        %961 = vmax.xlane.f32.xlu0 %v824
        %v962 = vpop.xlane.xlu0 %961
        %963 = vmax.xlane.f32.xlu0 %v829
        %v964 = vpop.xlane.xlu0 %963
        %965 = vmax.xlane.f32.xlu0 %v832
        %v966 = vpop.xlane.xlu0 %965
        %967 = vmax.xlane.f32.xlu0 %v837
        %v968 = vpop.xlane.xlu0 %967
        %969 = vmax.xlane.f32.xlu0 %v840
        %v970 = vpop.xlane.xlu0 %969
        %971 = vmax.xlane.f32.xlu0 %v845
        %v972 = vpop.xlane.xlu0 %971
        %973 = vmax.xlane.f32.xlu0 %v848
        %v974 = vpop.xlane.xlu0 %973
        %975 = vmax.xlane.f32.xlu0 %v853
        %v976 = vpop.xlane.xlu0 %975
        %977 = vmax.xlane.f32.xlu0 %v856
        %v978 = vpop.xlane.xlu0 %977
        %979 = vmax.xlane.f32.xlu0 %v861
        %v980 = vpop.xlane.xlu0 %979
        %981 = vmax.xlane.f32.xlu0 %v864
        %v982 = vpop.xlane.xlu0 %981
        %983 = vmax.xlane.f32.xlu0 %v869
        %v984 = vpop.xlane.xlu0 %983
        %985 = vmax.xlane.f32.xlu0 %v872
        %v986 = vpop.xlane.xlu0 %985
        %987 = vmax.xlane.f32.xlu0 %v877
        %v988 = vpop.xlane.xlu0 %987
        %989 = vmax.xlane.f32.xlu0 %v880
        %v990 = vpop.xlane.xlu0 %989
        %991 = vmax.xlane.f32.xlu0 %v885
        %v992 = vpop.xlane.xlu0 %991
        %993 = vmax.xlane.f32.xlu0 %v888
        %v994 = vpop.xlane.xlu0 %993
        %995 = vmax.xlane.f32.xlu0 %v893
        %v996 = vpop.xlane.xlu0 %995
        %997 = vmax.xlane.f32.xlu0 %v896
        %v998 = vpop.xlane.xlu0 %997
        %999 = vmax.xlane.f32.xlu0 %v901
        %v1000 = vpop.xlane.xlu0 %999
        %1001 = vmax.xlane.f32.xlu0 %v904
        %v1002 = vpop.xlane.xlu0 %1001
        %v1003 = vsub.f32 %v781, %v940
        %v1004 = vsub.f32 %v784, %v942
        %v1005 = vsub.f32 %v789, %v944
        %v1006 = vsub.f32 %v792, %v946
        %v1007 = vsub.f32 %v797, %v948
        %v1008 = vsub.f32 %v800, %v950
        %v1009 = vsub.f32 %v805, %v952
        %v1010 = vsub.f32 %v808, %v954
        %v1011 = vsub.f32 %v813, %v956
        %v1012 = vsub.f32 %v816, %v958
        %v1013 = vsub.f32 %v821, %v960
        %v1014 = vsub.f32 %v824, %v962
        %v1015 = vsub.f32 %v829, %v964
        %v1016 = vsub.f32 %v832, %v966
        %v1017 = vsub.f32 %v837, %v968
        %v1018 = vsub.f32 %v840, %v970
        %v1019 = vsub.f32 %v845, %v972
        %v1020 = vsub.f32 %v848, %v974
        %v1021 = vsub.f32 %v853, %v976
        %v1022 = vsub.f32 %v856, %v978
        %v1023 = vsub.f32 %v861, %v980
        %v1024 = vsub.f32 %v864, %v982
        %v1025 = vsub.f32 %v869, %v984
        %v1026 = vsub.f32 %v872, %v986
        %v1027 = vsub.f32 %v877, %v988
        %v1028 = vsub.f32 %v880, %v990
        %v1029 = vsub.f32 %v885, %v992
        %v1030 = vsub.f32 %v888, %v994
        %v1031 = vsub.f32 %v893, %v996
        %v1032 = vsub.f32 %v896, %v998
        %v1033 = vsub.f32 %v901, %v1000
        %v1034 = vsub.f32 %v904, %v1002
        %v1035 = vmul.f32 %v1003, 1.442695
        %v1036 = vpow.pop %v1035
        %v1037 = vmul.f32 %v1004, 1.442695
        %v1038 = vpow.pop %v1037
        %v1039 = vmul.f32 %v1005, 1.442695
        %v1040 = vpow.pop %v1039
        %v1041 = vmul.f32 %v1006, 1.442695
        %v1042 = vpow.pop %v1041
        %v1043 = vmul.f32 %v1007, 1.442695
        %v1044 = vpow.pop %v1043
        %v1045 = vmul.f32 %v1008, 1.442695
        %v1046 = vpow.pop %v1045
        %v1047 = vmul.f32 %v1009, 1.442695
        %v1048 = vpow.pop %v1047
        %v1049 = vmul.f32 %v1010, 1.442695
        %v1050 = vpow.pop %v1049
        %v1051 = vmul.f32 %v1011, 1.442695
        %v1052 = vpow.pop %v1051
        %v1053 = vmul.f32 %v1012, 1.442695
        %v1054 = vpow.pop %v1053
        %v1055 = vmul.f32 %v1013, 1.442695
        %v1056 = vpow.pop %v1055
        %v1057 = vmul.f32 %v1014, 1.442695
        %v1058 = vpow.pop %v1057
        %v1059 = vmul.f32 %v1015, 1.442695
        %v1060 = vpow.pop %v1059
        %v1061 = vmul.f32 %v1016, 1.442695
        %v1062 = vpow.pop %v1061
        %v1063 = vmul.f32 %v1017, 1.442695
        %v1064 = vpow.pop %v1063
        %v1065 = vmul.f32 %v1018, 1.442695
        %v1066 = vpow.pop %v1065
        %v1067 = vmul.f32 %v1019, 1.442695
        %v1068 = vpow.pop %v1067
        %v1069 = vmul.f32 %v1020, 1.442695
        %v1070 = vpow.pop %v1069
        %v1071 = vmul.f32 %v1021, 1.442695
        %v1072 = vpow.pop %v1071
        %v1073 = vmul.f32 %v1022, 1.442695
        %v1074 = vpow.pop %v1073
        %v1075 = vmul.f32 %v1023, 1.442695
        %v1076 = vpow.pop %v1075
        %v1077 = vmul.f32 %v1024, 1.442695
        %v1078 = vpow.pop %v1077
        %v1079 = vmul.f32 %v1025, 1.442695
        %v1080 = vpow.pop %v1079
        %v1081 = vmul.f32 %v1026, 1.442695
        %v1082 = vpow.pop %v1081
        %v1083 = vmul.f32 %v1027, 1.442695
        %v1084 = vpow.pop %v1083
        %v1085 = vmul.f32 %v1028, 1.442695
        %v1086 = vpow.pop %v1085
        %v1087 = vmul.f32 %v1029, 1.442695
        %v1088 = vpow.pop %v1087
        %v1089 = vmul.f32 %v1030, 1.442695
        %v1090 = vpow.pop %v1089
        %v1091 = vmul.f32 %v1031, 1.442695
        %v1092 = vpow.pop %v1091
        %v1093 = vmul.f32 %v1032, 1.442695
        %v1094 = vpow.pop %v1093
        %v1095 = vmul.f32 %v1033, 1.442695
        %v1096 = vpow.pop %v1095
        %v1097 = vmul.f32 %v1034, 1.442695
        %v1098 = vpow.pop %v1097
        %1099 = vadd.xlane.f32.xlu0 %v1036
        %v1100 = vpop.xlane.xlu0 %1099
        %1101 = vadd.xlane.f32.xlu0 %v1038
        %v1102 = vpop.xlane.xlu0 %1101
        %1103 = vadd.xlane.f32.xlu0 %v1040
        %v1104 = vpop.xlane.xlu0 %1103
        %1105 = vadd.xlane.f32.xlu0 %v1042
        %v1106 = vpop.xlane.xlu0 %1105
        %1107 = vadd.xlane.f32.xlu0 %v1044
        %v1108 = vpop.xlane.xlu0 %1107
        %1109 = vadd.xlane.f32.xlu0 %v1046
        %v1110 = vpop.xlane.xlu0 %1109
        %1111 = vadd.xlane.f32.xlu0 %v1048
        %v1112 = vpop.xlane.xlu0 %1111
        %1113 = vadd.xlane.f32.xlu0 %v1050
        %v1114 = vpop.xlane.xlu0 %1113
        %1115 = vadd.xlane.f32.xlu0 %v1052
        %v1116 = vpop.xlane.xlu0 %1115
        %1117 = vadd.xlane.f32.xlu0 %v1054
        %v1118 = vpop.xlane.xlu0 %1117
        %1119 = vadd.xlane.f32.xlu0 %v1056
        %v1120 = vpop.xlane.xlu0 %1119
        %1121 = vadd.xlane.f32.xlu0 %v1058
        %v1122 = vpop.xlane.xlu0 %1121
        %1123 = vadd.xlane.f32.xlu0 %v1060
        %v1124 = vpop.xlane.xlu0 %1123
        %1125 = vadd.xlane.f32.xlu0 %v1062
        %v1126 = vpop.xlane.xlu0 %1125
        %1127 = vadd.xlane.f32.xlu0 %v1064
        %v1128 = vpop.xlane.xlu0 %1127
        %1129 = vadd.xlane.f32.xlu0 %v1066
        %v1130 = vpop.xlane.xlu0 %1129
        %1131 = vadd.xlane.f32.xlu0 %v1068
        %v1132 = vpop.xlane.xlu0 %1131
        %1133 = vadd.xlane.f32.xlu0 %v1070
        %v1134 = vpop.xlane.xlu0 %1133
        %1135 = vadd.xlane.f32.xlu0 %v1072
        %v1136 = vpop.xlane.xlu0 %1135
        %1137 = vadd.xlane.f32.xlu0 %v1074
        %v1138 = vpop.xlane.xlu0 %1137
        %1139 = vadd.xlane.f32.xlu0 %v1076
        %v1140 = vpop.xlane.xlu0 %1139
        %1141 = vadd.xlane.f32.xlu0 %v1078
        %v1142 = vpop.xlane.xlu0 %1141
        %1143 = vadd.xlane.f32.xlu0 %v1080
        %v1144 = vpop.xlane.xlu0 %1143
        %1145 = vadd.xlane.f32.xlu0 %v1082
        %v1146 = vpop.xlane.xlu0 %1145
        %1147 = vadd.xlane.f32.xlu0 %v1084
        %v1148 = vpop.xlane.xlu0 %1147
        %1149 = vadd.xlane.f32.xlu0 %v1086
        %v1150 = vpop.xlane.xlu0 %1149
        %1151 = vadd.xlane.f32.xlu0 %v1088
        %v1152 = vpop.xlane.xlu0 %1151
        %1153 = vadd.xlane.f32.xlu0 %v1090
        %v1154 = vpop.xlane.xlu0 %1153
        %1155 = vadd.xlane.f32.xlu0 %v1092
        %v1156 = vpop.xlane.xlu0 %1155
        %1157 = vadd.xlane.f32.xlu0 %v1094
        %v1158 = vpop.xlane.xlu0 %1157
        %1159 = vadd.xlane.f32.xlu0 %v1096
        %v1160 = vpop.xlane.xlu0 %1159
        %1161 = vadd.xlane.f32.xlu0 %v1098
        %v1162 = vpop.xlane.xlu0 %1161
        %v1163 = vlog2.pop %v1100
        %v1164 = vmul.f32 %v1163, 0.6931472
        %v1165 = vlog2.pop %v1102
        %v1166 = vmul.f32 %v1165, 0.6931472
        %v1167 = vlog2.pop %v1104
        %v1168 = vmul.f32 %v1167, 0.6931472
        %v1169 = vlog2.pop %v1106
        %v1170 = vmul.f32 %v1169, 0.6931472
        %v1171 = vlog2.pop %v1108
        %v1172 = vmul.f32 %v1171, 0.6931472
        %v1173 = vlog2.pop %v1110
        %v1174 = vmul.f32 %v1173, 0.6931472
        %v1175 = vlog2.pop %v1112
        %v1176 = vmul.f32 %v1175, 0.6931472
        %v1177 = vlog2.pop %v1114
        %v1178 = vmul.f32 %v1177, 0.6931472
        %v1179 = vlog2.pop %v1116
        %v1180 = vmul.f32 %v1179, 0.6931472
        %v1181 = vlog2.pop %v1118
        %v1182 = vmul.f32 %v1181, 0.6931472
        %v1183 = vlog2.pop %v1120
        %v1184 = vmul.f32 %v1183, 0.6931472
        %v1185 = vlog2.pop %v1122
        %v1186 = vmul.f32 %v1185, 0.6931472
        %v1187 = vlog2.pop %v1124
        %v1188 = vmul.f32 %v1187, 0.6931472
        %v1189 = vlog2.pop %v1126
        %v1190 = vmul.f32 %v1189, 0.6931472
        %v1191 = vlog2.pop %v1128
        %v1192 = vmul.f32 %v1191, 0.6931472
        %v1193 = vlog2.pop %v1130
        %v1194 = vmul.f32 %v1193, 0.6931472
        %v1195 = vlog2.pop %v1132
        %v1196 = vmul.f32 %v1195, 0.6931472
        %v1197 = vlog2.pop %v1134
        %v1198 = vmul.f32 %v1197, 0.6931472
        %v1199 = vlog2.pop %v1136
        %v1200 = vmul.f32 %v1199, 0.6931472
        %v1201 = vlog2.pop %v1138
        %v1202 = vmul.f32 %v1201, 0.6931472
        %v1203 = vlog2.pop %v1140
        %v1204 = vmul.f32 %v1203, 0.6931472
        %v1205 = vlog2.pop %v1142
        %v1206 = vmul.f32 %v1205, 0.6931472
        %v1207 = vlog2.pop %v1144
        %v1208 = vmul.f32 %v1207, 0.6931472
        %v1209 = vlog2.pop %v1146
        %v1210 = vmul.f32 %v1209, 0.6931472
        %v1211 = vlog2.pop %v1148
        %v1212 = vmul.f32 %v1211, 0.6931472
        %v1213 = vlog2.pop %v1150
        %v1214 = vmul.f32 %v1213, 0.6931472
        %v1215 = vlog2.pop %v1152
        %v1216 = vmul.f32 %v1215, 0.6931472
        %v1217 = vlog2.pop %v1154
        %v1218 = vmul.f32 %v1217, 0.6931472
        %v1219 = vlog2.pop %v1156
        %v1220 = vmul.f32 %v1219, 0.6931472
        %v1221 = vlog2.pop %v1158
        %v1222 = vmul.f32 %v1221, 0.6931472
        %v1223 = vlog2.pop %v1160
        %v1224 = vmul.f32 %v1223, 0.6931472
        %v1225 = vlog2.pop %v1162
        %v1226 = vmul.f32 %v1225, 0.6931472
        %v1227 = vlaneseq
        %v1228 = vand.u32 %v1227, 127
        %v1229 = vld [vmem:[%s337] sm:$0xff]
        %v1230 = vld [vmem:[%s337 + $0x8] sm:$0xff]
        %v1231 = vld [vmem:[%s337 + $0x10] sm:$0xff]
        %v1232 = vld [vmem:[%s337 + $0x18] sm:$0xff]
        %v1233 = vld [vmem:[%s337 + $0x20] sm:$0xff]
        %v1234 = vld [vmem:[%s337 + $0x28] sm:$0xff]
        %v1235 = vld [vmem:[%s337 + $0x30] sm:$0xff]
        %v1236 = vld [vmem:[%s337 + $0x38] sm:$0xff]
        %v1237 = vld [vmem:[%s337 + $0x40] sm:$0xff]
        %v1238 = vld [vmem:[%s337 + $0x48] sm:$0xff]
        %v1239 = vld [vmem:[%s337 + $0x50] sm:$0xff]
        %v1240 = vld [vmem:[%s337 + $0x58] sm:$0xff]
        %v1241 = vld [vmem:[%s337 + $0x60] sm:$0xff]
        %v1242 = vld [vmem:[%s337 + $0x68] sm:$0xff]
        %v1243 = vld [vmem:[%s337 + $0x70] sm:$0xff]
        %v1244 = vld [vmem:[%s337 + $0x78] sm:$0xff]
        %v1245 = vld [vmem:[%s337 + $0x80] sm:$0xff]
        %v1246 = vld [vmem:[%s337 + $0x88] sm:$0xff]
        %v1247 = vld [vmem:[%s337 + $0x90] sm:$0xff]
        %v1248 = vld [vmem:[%s337 + $0x98] sm:$0xff]
        %v1249 = vld [vmem:[%s337 + $0xa0] sm:$0xff]
        %v1250 = vld [vmem:[%s337 + $0xa8] sm:$0xff]
        %v1251 = vld [vmem:[%s337 + $0xb0] sm:$0xff]
        %v1252 = vld [vmem:[%s337 + $0xb8] sm:$0xff]
        %v1253 = vld [vmem:[%s337 + $0xc0] sm:$0xff]
        %v1254 = vld [vmem:[%s337 + $0xc8] sm:$0xff]
        %v1255 = vld [vmem:[%s337 + $0xd0] sm:$0xff]
        %v1256 = vld [vmem:[%s337 + $0xd8] sm:$0xff]
        %v1257 = vld [vmem:[%s337 + $0xe0] sm:$0xff]
        %v1258 = vld [vmem:[%s337 + $0xe8] sm:$0xff]
        %v1259 = vld [vmem:[%s337 + $0xf0] sm:$0xff]
        %v1260 = vld [vmem:[%s337 + $0xf8] sm:$0xff]
        %1261 = vset.pattern.permute.xlu0 0
        %1262 = vperm.xlu0 %1261, %v1229
        %v1263 = vpop.permute.xlu0 %1262
        %1264 = vset.pattern.permute.xlu0 0
        %1265 = vperm.xlu0 %1264, %v1230
        %v1266 = vpop.permute.xlu0 %1265
        %1267 = vset.pattern.permute.xlu0 0
        %1268 = vperm.xlu0 %1267, %v1231
        %v1269 = vpop.permute.xlu0 %1268
        %1270 = vset.pattern.permute.xlu0 0
        %1271 = vperm.xlu0 %1270, %v1232
        %v1272 = vpop.permute.xlu0 %1271
        %1273 = vset.pattern.permute.xlu0 0
        %1274 = vperm.xlu0 %1273, %v1233
        %v1275 = vpop.permute.xlu0 %1274
        %1276 = vset.pattern.permute.xlu0 0
        %1277 = vperm.xlu0 %1276, %v1234
        %v1278 = vpop.permute.xlu0 %1277
        %1279 = vset.pattern.permute.xlu0 0
        %1280 = vperm.xlu0 %1279, %v1235
        %v1281 = vpop.permute.xlu0 %1280
        %1282 = vset.pattern.permute.xlu0 0
        %1283 = vperm.xlu0 %1282, %v1236
        %v1284 = vpop.permute.xlu0 %1283
        %1285 = vset.pattern.permute.xlu0 0
        %1286 = vperm.xlu0 %1285, %v1237
        %v1287 = vpop.permute.xlu0 %1286
        %1288 = vset.pattern.permute.xlu0 0
        %1289 = vperm.xlu0 %1288, %v1238
        %v1290 = vpop.permute.xlu0 %1289
        %1291 = vset.pattern.permute.xlu0 0
        %1292 = vperm.xlu0 %1291, %v1239
        %v1293 = vpop.permute.xlu0 %1292
        %1294 = vset.pattern.permute.xlu0 0
        %1295 = vperm.xlu0 %1294, %v1240
        %v1296 = vpop.permute.xlu0 %1295
        %1297 = vset.pattern.permute.xlu0 0
        %1298 = vperm.xlu0 %1297, %v1241
        %v1299 = vpop.permute.xlu0 %1298
        %1300 = vset.pattern.permute.xlu0 0
        %1301 = vperm.xlu0 %1300, %v1242
        %v1302 = vpop.permute.xlu0 %1301
        %1303 = vset.pattern.permute.xlu0 0
        %1304 = vperm.xlu0 %1303, %v1243
        %v1305 = vpop.permute.xlu0 %1304
        %1306 = vset.pattern.permute.xlu0 0
        %1307 = vperm.xlu0 %1306, %v1244
        %v1308 = vpop.permute.xlu0 %1307
        %1309 = vset.pattern.permute.xlu0 0
        %1310 = vperm.xlu0 %1309, %v1245
        %v1311 = vpop.permute.xlu0 %1310
        %1312 = vset.pattern.permute.xlu0 0
        %1313 = vperm.xlu0 %1312, %v1246
        %v1314 = vpop.permute.xlu0 %1313
        %1315 = vset.pattern.permute.xlu0 0
        %1316 = vperm.xlu0 %1315, %v1247
        %v1317 = vpop.permute.xlu0 %1316
        %1318 = vset.pattern.permute.xlu0 0
        %1319 = vperm.xlu0 %1318, %v1248
        %v1320 = vpop.permute.xlu0 %1319
        %1321 = vset.pattern.permute.xlu0 0
        %1322 = vperm.xlu0 %1321, %v1249
        %v1323 = vpop.permute.xlu0 %1322
        %1324 = vset.pattern.permute.xlu0 0
        %1325 = vperm.xlu0 %1324, %v1250
        %v1326 = vpop.permute.xlu0 %1325
        %1327 = vset.pattern.permute.xlu0 0
        %1328 = vperm.xlu0 %1327, %v1251
        %v1329 = vpop.permute.xlu0 %1328
        %1330 = vset.pattern.permute.xlu0 0
        %1331 = vperm.xlu0 %1330, %v1252
        %v1332 = vpop.permute.xlu0 %1331
        %1333 = vset.pattern.permute.xlu0 0
        %1334 = vperm.xlu0 %1333, %v1253
        %v1335 = vpop.permute.xlu0 %1334
        %1336 = vset.pattern.permute.xlu0 0
        %1337 = vperm.xlu0 %1336, %v1254
        %v1338 = vpop.permute.xlu0 %1337
        %1339 = vset.pattern.permute.xlu0 0
        %1340 = vperm.xlu0 %1339, %v1255
        %v1341 = vpop.permute.xlu0 %1340
        %1342 = vset.pattern.permute.xlu0 0
        %1343 = vperm.xlu0 %1342, %v1256
        %v1344 = vpop.permute.xlu0 %1343
        %1345 = vset.pattern.permute.xlu0 0
        %1346 = vperm.xlu0 %1345, %v1257
        %v1347 = vpop.permute.xlu0 %1346
        %1348 = vset.pattern.permute.xlu0 0
        %1349 = vperm.xlu0 %1348, %v1258
        %v1350 = vpop.permute.xlu0 %1349
        %1351 = vset.pattern.permute.xlu0 0
        %1352 = vperm.xlu0 %1351, %v1259
        %v1353 = vpop.permute.xlu0 %1352
        %1354 = vset.pattern.permute.xlu0 0
        %1355 = vperm.xlu0 %1354, %v1260
        %v1356 = vpop.permute.xlu0 %1355
        %vm1357 = vcmp.eq.s32.totalorder %v1228, %v1263
        %vm1358 = vcmp.eq.s32.totalorder %v1228, %v1266
        %vm1359 = vcmp.eq.s32.totalorder %v1228, %v1269
        %vm1360 = vcmp.eq.s32.totalorder %v1228, %v1272
        %vm1361 = vcmp.eq.s32.totalorder %v1228, %v1275
        %vm1362 = vcmp.eq.s32.totalorder %v1228, %v1278
        %vm1363 = vcmp.eq.s32.totalorder %v1228, %v1281
        %vm1364 = vcmp.eq.s32.totalorder %v1228, %v1284
        %vm1365 = vcmp.eq.s32.totalorder %v1228, %v1287
        %vm1366 = vcmp.eq.s32.totalorder %v1228, %v1290
        %vm1367 = vcmp.eq.s32.totalorder %v1228, %v1293
        %vm1368 = vcmp.eq.s32.totalorder %v1228, %v1296
        %vm1369 = vcmp.eq.s32.totalorder %v1228, %v1299
        %vm1370 = vcmp.eq.s32.totalorder %v1228, %v1302
        %vm1371 = vcmp.eq.s32.totalorder %v1228, %v1305
        %vm1372 = vcmp.eq.s32.totalorder %v1228, %v1308
        %vm1373 = vcmp.eq.s32.totalorder %v1228, %v1311
        %vm1374 = vcmp.eq.s32.totalorder %v1228, %v1314
        %vm1375 = vcmp.eq.s32.totalorder %v1228, %v1317
        %vm1376 = vcmp.eq.s32.totalorder %v1228, %v1320
        %vm1377 = vcmp.eq.s32.totalorder %v1228, %v1323
        %vm1378 = vcmp.eq.s32.totalorder %v1228, %v1326
        %vm1379 = vcmp.eq.s32.totalorder %v1228, %v1329
        %vm1380 = vcmp.eq.s32.totalorder %v1228, %v1332
        %vm1381 = vcmp.eq.s32.totalorder %v1228, %v1335
        %vm1382 = vcmp.eq.s32.totalorder %v1228, %v1338
        %vm1383 = vcmp.eq.s32.totalorder %v1228, %v1341
        %vm1384 = vcmp.eq.s32.totalorder %v1228, %v1344
        %vm1385 = vcmp.eq.s32.totalorder %v1228, %v1347
        %vm1386 = vcmp.eq.s32.totalorder %v1228, %v1350
        %vm1387 = vcmp.eq.s32.totalorder %v1228, %v1353
        %vm1388 = vcmp.eq.s32.totalorder %v1228, %v1356
        %v1389 = vsel %vm1357, %v1003, 0.0
        %v1390 = vsel %vm1358, %v1004, 0.0
        %v1391 = vsel %vm1359, %v1005, 0.0
        %v1392 = vsel %vm1360, %v1006, 0.0
        %v1393 = vsel %vm1361, %v1007, 0.0
        %v1394 = vsel %vm1362, %v1008, 0.0
        %v1395 = vsel %vm1363, %v1009, 0.0
        %v1396 = vsel %vm1364, %v1010, 0.0
        %v1397 = vsel %vm1365, %v1011, 0.0
        %v1398 = vsel %vm1366, %v1012, 0.0
        %v1399 = vsel %vm1367, %v1013, 0.0
        %v1400 = vsel %vm1368, %v1014, 0.0
        %v1401 = vsel %vm1369, %v1015, 0.0
        %v1402 = vsel %vm1370, %v1016, 0.0
        %v1403 = vsel %vm1371, %v1017, 0.0
        %v1404 = vsel %vm1372, %v1018, 0.0
        %v1405 = vsel %vm1373, %v1019, 0.0
        %v1406 = vsel %vm1374, %v1020, 0.0
        %v1407 = vsel %vm1375, %v1021, 0.0
        %v1408 = vsel %vm1376, %v1022, 0.0
        %v1409 = vsel %vm1377, %v1023, 0.0
        %v1410 = vsel %vm1378, %v1024, 0.0
        %v1411 = vsel %vm1379, %v1025, 0.0
        %v1412 = vsel %vm1380, %v1026, 0.0
        %v1413 = vsel %vm1381, %v1027, 0.0
        %v1414 = vsel %vm1382, %v1028, 0.0
        %v1415 = vsel %vm1383, %v1029, 0.0
        %v1416 = vsel %vm1384, %v1030, 0.0
        %v1417 = vsel %vm1385, %v1031, 0.0
        %v1418 = vsel %vm1386, %v1032, 0.0
        %v1419 = vsel %vm1387, %v1033, 0.0
        %v1420 = vsel %vm1388, %v1034, 0.0
        %1421 = vadd.xlane.f32.xlu0 %v1389
        %v1422 = vpop.xlane.xlu0 %1421
        %1423 = vadd.xlane.f32.xlu0 %v1390
        %v1424 = vpop.xlane.xlu0 %1423
        %1425 = vadd.xlane.f32.xlu0 %v1391
        %v1426 = vpop.xlane.xlu0 %1425
        %1427 = vadd.xlane.f32.xlu0 %v1392
        %v1428 = vpop.xlane.xlu0 %1427
        %1429 = vadd.xlane.f32.xlu0 %v1393
        %v1430 = vpop.xlane.xlu0 %1429
        %1431 = vadd.xlane.f32.xlu0 %v1394
        %v1432 = vpop.xlane.xlu0 %1431
        %1433 = vadd.xlane.f32.xlu0 %v1395
        %v1434 = vpop.xlane.xlu0 %1433
        %1435 = vadd.xlane.f32.xlu0 %v1396
        %v1436 = vpop.xlane.xlu0 %1435
        %1437 = vadd.xlane.f32.xlu0 %v1397
        %v1438 = vpop.xlane.xlu0 %1437
        %1439 = vadd.xlane.f32.xlu0 %v1398
        %v1440 = vpop.xlane.xlu0 %1439
        %1441 = vadd.xlane.f32.xlu0 %v1399
        %v1442 = vpop.xlane.xlu0 %1441
        %1443 = vadd.xlane.f32.xlu0 %v1400
        %v1444 = vpop.xlane.xlu0 %1443
        %1445 = vadd.xlane.f32.xlu0 %v1401
        %v1446 = vpop.xlane.xlu0 %1445
        %1447 = vadd.xlane.f32.xlu0 %v1402
        %v1448 = vpop.xlane.xlu0 %1447
        %1449 = vadd.xlane.f32.xlu0 %v1403
        %v1450 = vpop.xlane.xlu0 %1449
        %1451 = vadd.xlane.f32.xlu0 %v1404
        %v1452 = vpop.xlane.xlu0 %1451
        %1453 = vadd.xlane.f32.xlu0 %v1405
        %v1454 = vpop.xlane.xlu0 %1453
        %1455 = vadd.xlane.f32.xlu0 %v1406
        %v1456 = vpop.xlane.xlu0 %1455
        %1457 = vadd.xlane.f32.xlu0 %v1407
        %v1458 = vpop.xlane.xlu0 %1457
        %1459 = vadd.xlane.f32.xlu0 %v1408
        %v1460 = vpop.xlane.xlu0 %1459
        %1461 = vadd.xlane.f32.xlu0 %v1409
        %v1462 = vpop.xlane.xlu0 %1461
        %1463 = vadd.xlane.f32.xlu0 %v1410
        %v1464 = vpop.xlane.xlu0 %1463
        %1465 = vadd.xlane.f32.xlu0 %v1411
        %v1466 = vpop.xlane.xlu0 %1465
        %1467 = vadd.xlane.f32.xlu0 %v1412
        %v1468 = vpop.xlane.xlu0 %1467
        %1469 = vadd.xlane.f32.xlu0 %v1413
        %v1470 = vpop.xlane.xlu0 %1469
        %1471 = vadd.xlane.f32.xlu0 %v1414
        %v1472 = vpop.xlane.xlu0 %1471
        %1473 = vadd.xlane.f32.xlu0 %v1415
        %v1474 = vpop.xlane.xlu0 %1473
        %1475 = vadd.xlane.f32.xlu0 %v1416
        %v1476 = vpop.xlane.xlu0 %1475
        %1477 = vadd.xlane.f32.xlu0 %v1417
        %v1478 = vpop.xlane.xlu0 %1477
        %1479 = vadd.xlane.f32.xlu0 %v1418
        %v1480 = vpop.xlane.xlu0 %1479
        %1481 = vadd.xlane.f32.xlu0 %v1419
        %v1482 = vpop.xlane.xlu0 %1481
        %1483 = vadd.xlane.f32.xlu0 %v1420
        %v1484 = vpop.xlane.xlu0 %1483
        %v1485 = vsub.f32 %v1164, %v1422
        %v1486 = vsub.f32 %v1166, %v1424
        %v1487 = vsub.f32 %v1168, %v1426
        %v1488 = vsub.f32 %v1170, %v1428
        %v1489 = vsub.f32 %v1172, %v1430
        %v1490 = vsub.f32 %v1174, %v1432
        %v1491 = vsub.f32 %v1176, %v1434
        %v1492 = vsub.f32 %v1178, %v1436
        %v1493 = vsub.f32 %v1180, %v1438
        %v1494 = vsub.f32 %v1182, %v1440
        %v1495 = vsub.f32 %v1184, %v1442
        %v1496 = vsub.f32 %v1186, %v1444
        %v1497 = vsub.f32 %v1188, %v1446
        %v1498 = vsub.f32 %v1190, %v1448
        %v1499 = vsub.f32 %v1192, %v1450
        %v1500 = vsub.f32 %v1194, %v1452
        %v1501 = vsub.f32 %v1196, %v1454
        %v1502 = vsub.f32 %v1198, %v1456
        %v1503 = vsub.f32 %v1200, %v1458
        %v1504 = vsub.f32 %v1202, %v1460
        %v1505 = vsub.f32 %v1204, %v1462
        %v1506 = vsub.f32 %v1206, %v1464
        %v1507 = vsub.f32 %v1208, %v1466
        %v1508 = vsub.f32 %v1210, %v1468
        %v1509 = vsub.f32 %v1212, %v1470
        %v1510 = vsub.f32 %v1214, %v1472
        %v1511 = vsub.f32 %v1216, %v1474
        %v1512 = vsub.f32 %v1218, %v1476
        %v1513 = vsub.f32 %v1220, %v1478
        %v1514 = vsub.f32 %v1222, %v1480
        %v1515 = vsub.f32 %v1224, %v1482
        %v1516 = vsub.f32 %v1226, %v1484
        %vm1517 = vcmask 7168
        %1518 = vst.msk [vmem:[%s344] sm:$0xff] %vm1517, %v1485
        %1519 = vst.msk [vmem:[%s344 + $0x8] sm:$0xff] %vm1517, %v1486
        %1520 = vst.msk [vmem:[%s344 + $0x10] sm:$0xff] %vm1517, %v1487
        %1521 = vst.msk [vmem:[%s344 + $0x18] sm:$0xff] %vm1517, %v1488
        %1522 = vst.msk [vmem:[%s344 + $0x20] sm:$0xff] %vm1517, %v1489
        %1523 = vst.msk [vmem:[%s344 + $0x28] sm:$0xff] %vm1517, %v1490
        %1524 = vst.msk [vmem:[%s344 + $0x30] sm:$0xff] %vm1517, %v1491
        %1525 = vst.msk [vmem:[%s344 + $0x38] sm:$0xff] %vm1517, %v1492
        %1526 = vst.msk [vmem:[%s344 + $0x40] sm:$0xff] %vm1517, %v1493
        %1527 = vst.msk [vmem:[%s344 + $0x48] sm:$0xff] %vm1517, %v1494
        %1528 = vst.msk [vmem:[%s344 + $0x50] sm:$0xff] %vm1517, %v1495
        %1529 = vst.msk [vmem:[%s344 + $0x58] sm:$0xff] %vm1517, %v1496
        %1530 = vst.msk [vmem:[%s344 + $0x60] sm:$0xff] %vm1517, %v1497
        %1531 = vst.msk [vmem:[%s344 + $0x68] sm:$0xff] %vm1517, %v1498
        %1532 = vst.msk [vmem:[%s344 + $0x70] sm:$0xff] %vm1517, %v1499
        %1533 = vst.msk [vmem:[%s344 + $0x78] sm:$0xff] %vm1517, %v1500
        %1534 = vst.msk [vmem:[%s344 + $0x80] sm:$0xff] %vm1517, %v1501
        %1535 = vst.msk [vmem:[%s344 + $0x88] sm:$0xff] %vm1517, %v1502
        %1536 = vst.msk [vmem:[%s344 + $0x90] sm:$0xff] %vm1517, %v1503
        %1537 = vst.msk [vmem:[%s344 + $0x98] sm:$0xff] %vm1517, %v1504
        %1538 = vst.msk [vmem:[%s344 + $0xa0] sm:$0xff] %vm1517, %v1505
        %1539 = vst.msk [vmem:[%s344 + $0xa8] sm:$0xff] %vm1517, %v1506
        %1540 = vst.msk [vmem:[%s344 + $0xb0] sm:$0xff] %vm1517, %v1507
        %1541 = vst.msk [vmem:[%s344 + $0xb8] sm:$0xff] %vm1517, %v1508
        %1542 = vst.msk [vmem:[%s344 + $0xc0] sm:$0xff] %vm1517, %v1509
        %1543 = vst.msk [vmem:[%s344 + $0xc8] sm:$0xff] %vm1517, %v1510
        %1544 = vst.msk [vmem:[%s344 + $0xd0] sm:$0xff] %vm1517, %v1511
        %1545 = vst.msk [vmem:[%s344 + $0xd8] sm:$0xff] %vm1517, %v1512
        %1546 = vst.msk [vmem:[%s344 + $0xe0] sm:$0xff] %vm1517, %v1513
        %1547 = vst.msk [vmem:[%s344 + $0xe8] sm:$0xff] %vm1517, %v1514
        %1548 = vst.msk [vmem:[%s344 + $0xf0] sm:$0xff] %vm1517, %v1515
        %1549 = vst.msk [vmem:[%s344 + $0xf8] sm:$0xff] %vm1517, %v1516
        %s1550 = sand.u32 %s168, 1
        %s1551 = scalar_lea.sflag [#allocation4], %s1550
        %s1552 = sand.u32 %s168, 1
        %s1553 = smul.addr %s1552, 256
        %s1554 = scalar_lea.vmem [#allocation7], %s1553
        %s1555 = smul.u32 32, %s24
        %p1556 = scmp.lt.s32.totalorder %s1555, 63
        %s1557 = scalar_select %p1556, %s1555, 63
        %s1558 = smul.addr %s1557, 8
        %s1559 = scalar_lea.vmem %s7, %s1558
        // Predicated region
        $region53: #{tpu_custom_call.1} parent=43 // pred_check
          %p1560 = pneg %p178
        $region54: #{tpu_custom_call.1} parent=43 // pred_check_branch
          %1562 = sbr.rel (%p1560) target = $region56
        $region55: #{tpu_custom_call.1} parent=43 // pred_region
          %s1563 = smul.u32 32, %s24
          %s1565 = ssub.s32 4096, 4096
          %1566 = vsyncadd %s1551, %s1565
          %s1567 = smul.addr %s1563, 128
          %s1568 = scalar_lea.hbm %s6, %s1567
          %s1569 = sshll.u32 %s1554, 4
          %s1570 = int_to_ptr.vmem [resolvable:$true] %s1569
          %1575 = dma.vmem_to_hbm [thread:$0]  %s1570, 4096, %s1568, %s1551, 128, 128, 8
        $region56: #{tpu_custom_call.1} parent=43 // pred_fallthru
          _
        // Predicated region
        $region57: #{tpu_custom_call.1} parent=43 // pred_check
          %p1576 = pneg %p204
        $region58: #{tpu_custom_call.1} parent=43 // pred_check_branch
          %1578 = sbr.rel (%p1576) target = $region60
        $region59: #{tpu_custom_call.1} parent=43 // pred_region
          %s1579 = smul.u32 32, %s24
        $region60: #{tpu_custom_call.1} parent=43 // pred_fallthru
          _
      $region44: #{tpu_custom_call.1} parent=5 // pred_fallthru
        _
      %p1580 = scmp.le.s32.totalorder 2, %s19
      // Predicated region
      $region61: #{tpu_custom_call.1} parent=5 // pred_check
        %p1581 = pneg %p1580
      $region62: #{tpu_custom_call.1} parent=5 // pred_check_branch
        %1583 = sbr.rel (%p1581) target = $region64
      $region63: #{tpu_custom_call.1} parent=5 // pred_region
        %s1584 = ssub.s32 %s19, 2
        // Predicated region
        $region65: #{tpu_custom_call.1} parent=63 // pred_check
          %p1585 = pneg %p184
        $region66: #{tpu_custom_call.1} parent=63 // pred_check_branch
          %1587 = sbr.rel (%p1585) target = $region68
        $region67: #{tpu_custom_call.1} parent=63 // pred_region
          %s1588 = sand.u32 %s169, 1
          %s1589 = scalar_lea.sflag [#allocation4], %s1588
          %s1590 = sand.u32 %s169, 1
          %s1591 = smul.addr %s1590, 256
          %s1592 = scalar_lea.vmem [#allocation7], %s1591
          %1593 = dma.done %s1589, 4096
        $region68: #{tpu_custom_call.1} parent=63 // pred_fallthru
          _
        // Predicated region
        $region69: #{tpu_custom_call.1} parent=63 // pred_check
          %p1594 = pneg %p210
        $region70: #{tpu_custom_call.1} parent=63 // pred_check_branch
          %1596 = sbr.rel (%p1594) target = $region72
        $region71: #{tpu_custom_call.1} parent=63 // pred_region
          %s1597 = smul.u32 32, %s25
          %p1598 = scmp.lt.s32.totalorder %s1597, 63
          %s1599 = scalar_select %p1598, %s1597, 63
          %s1600 = smul.addr %s1599, 8
          %s1601 = scalar_lea.vmem %s7, %s1600
        $region72: #{tpu_custom_call.1} parent=63 // pred_fallthru
          _
      $region64: #{tpu_custom_call.1} parent=5 // pred_fallthru
        _
    $region6: #{tpu_custom_call.1} parent=1 // loop_footer
      %s23 = sadd.s32 1, %s19
    $region7: #{tpu_custom_call.1} parent=1 // loop_footer_branch
      %18 = sbr.rel target = $region3
    $region8: #{tpu_custom_call.1} parent=1 // loop_exit
      _
    %1602 = vsyncpa [#allocation3], 1
    %s1603 = scalar_lea.sflag [#allocation3], 1
    %1604 = vsyncpa %s1603, 1
    %1605 = vsyncpa [#allocation6], 1
    %1606 = vsyncpa [#allocation4], 1
    %s1607 = scalar_lea.sflag [#allocation4], 1
    %1608 = vsyncpa %s1607, 1

</llo_original>
